<compile_context>
chip_gen: v6e
topology: v6e:2x2x1
jax: 0.10.0
libtpu: 0.0.40
codegen_flags: <defaults>
</compile_context>

<pallas_src>
import functools

import jax
import jax.numpy as jnp
from jax.experimental import pallas as pl
from jax.experimental.pallas import tpu as pltpu

LN_EPS = 1e-5  # torch.nn.LayerNorm default


def _layernorm(x, g, b):
    mu = jnp.mean(x, axis=-1, keepdims=True)
    xc = x - mu
    var = jnp.mean(xc * xc, axis=-1, keepdims=True)
    return xc * jax.lax.rsqrt(var + LN_EPS) * g + b


def bert_stack_kernel(x_ref, wqkv_ref, wo_ref, w1_ref, w2_ref, vecs_ref,
                      b1_ref, norm_ref, o_ref, x_sc, ctx_sc,
                      *, heads, dim_head, n_valid):
    """Grid = (batch_slab, layer). One pre-LN encoder block per (s, l) step:
         x = x + W_o(softmax(q k^T * scale) v)        (q,k,v from LN(x))
         x = x + W2 gelu(W1 LN(x) + b1) + b2
       The whole slab's residual stream (Bs*S, D) is resident in VMEM scratch
       across the layer axis; the final LayerNorm is fused into the last
       layer step and written back in bf16.
    """
    l = pl.program_id(1)
    Bs, S, D = x_ref.shape
    HD = heads * dim_head

    # layer 0: pull the (padded) slab embeddings into the resident residual
    @pl.when(l == 0)
    def _():
        for b in range(Bs):
            x_sc[b * S:(b + 1) * S, :] = x_ref[b]

    x = x_sc[...]                                            # (Bs*S, D) f32

    vecs = vecs_ref[0]                                       # (6, D) f32
    ln1_g, ln1_b = vecs[0:1], vecs[1:2]
    bo = vecs[2:3]
    ln2_g, ln2_b = vecs[3:4], vecs[4:5]
    b2 = vecs[5:6]

    # ---- self-attention branch (pre-LN) ----
    xn = _layernorm(x, ln1_g, ln1_b)
    # single full-width q|k|v projection for the whole slab; bf16 operands,
    # f32 accumulation, then one bf16 materialization (no extra f32 temp).
    # (the 1/sqrt(dim_head) scale is pre-folded into the q columns of wqkv.)
    qkv = jnp.dot(xn.astype(jnp.bfloat16), wqkv_ref[0],
                  preferred_element_type=jnp.float32).astype(jnp.bfloat16)

    if n_valid < S:
        # key-padding bias as a (1, S) row, broadcast over queries
        kbias = jnp.where(
            jax.lax.broadcasted_iota(jnp.int32, (1, S), 1) < n_valid,
            jnp.float32(0.0), jnp.float32(-1e30))
    else:
        kbias = None

    for b in range(Bs):                                      # static unroll
        row0 = b * S
        qkv_b = qkv[row0:row0 + S, :]                        # (S, 3HD) bf16
        # one K transpose per (batch, layer); per-head K is a sublane slice
        kt_b = qkv_b[:, HD:2 * HD].T                         # (HD, S) bf16
        for h in range(heads):                               # static unroll
            lo = h * dim_head
            q_h = qkv_b[:, lo:lo + dim_head]                 # (S, dh)
            k_ht = kt_b[lo:lo + dim_head, :]                 # (dh, S)
            v_h = qkv_b[:, 2 * HD + lo:2 * HD + lo + dim_head]
            s = jnp.dot(q_h, k_ht,
                        preferred_element_type=jnp.float32)  # (S, S) f32
            if kbias is not None:
                s = s + kbias
            m = jnp.max(s, axis=-1, keepdims=True)
            e = jnp.exp(s - m)
            p = e * pl.reciprocal(jnp.sum(e, axis=-1, keepdims=True),
                                  approx=True)
            ctx = jnp.dot(p.astype(jnp.bfloat16), v_h,
                          preferred_element_type=jnp.float32)  # (S, dh)
            ctx_sc[row0:row0 + S, lo:lo + dim_head] = ctx.astype(jnp.bfloat16)

    # fused output projection: ONE (Bs*S, HD) x (HD, D) matmul
    attn_out = jnp.dot(ctx_sc[...], wo_ref[0],
                       preferred_element_type=jnp.float32)   # (Bs*S, D)
    x = x + attn_out + bo

    # ---- feed-forward branch (pre-LN) ----
    # TODO(synk): v7x-only fp8 w1/w2 (per-channel scales) and Dff tiling for
    # very large D are not implemented; bf16 weights are used on all gens.
    xn2 = _layernorm(x, ln2_g, ln2_b)
    h1 = jnp.dot(xn2.astype(jnp.bfloat16), w1_ref[0],
                 preferred_element_type=jnp.float32) + b1_ref[0]
    # TODO(synk): PyTorch nn.GELU defaults to the exact erf formulation; erf
    # has no guaranteed Mosaic lowering, so the tanh approximation is used.
    h1 = jax.nn.gelu(h1, approximate=True)
    ff = jnp.dot(h1.astype(jnp.bfloat16), w2_ref[0],
                 preferred_element_type=jnp.float32)
    x = x + ff + b2

    x_sc[...] = x

    # last layer: fused final LayerNorm straight into the (bf16) output block
    @pl.when(l == pl.num_programs(1) - 1)
    def _():
        xf = _layernorm(x, norm_ref[0:1], norm_ref[1:2])
        for b in range(Bs):
            o_ref[b] = xf[b * S:(b + 1) * S, :].astype(o_ref.dtype)


def _round_up(n, m):
    return ((n + m - 1) // m) * m


def _pad_seq_len(s):
    # lane-dense (multiple of 128) attention-score tiles for real sequence
    # lengths (e.g. 77 -> 128); sublane-aligned (multiple of 8) for tiny ones.
    return _round_up(s, 128) if s >= 64 else _round_up(s, 8)


def _vmem_limit_bytes(Bs, S, D, HD, Dff):
    rows = Bs * S
    per_layer_w = (D * 3 * HD + HD * D + D * Dff + Dff * D) * 2   # bf16 mats
    per_layer_v = (6 * D + Dff) * 4                               # f32 vectors
    need = 2 * (per_layer_w + per_layer_v)     # double-buffered layer weights
    need += rows * D * 4                        # x input block (resident)
    need += 2 * rows * D * 2                    # bf16 output double-buffer
    need += rows * D * 4                        # residual scratch
    need += rows * HD * 2                       # ctx scratch (bf16)
    need += rows * (3 * HD * 2 + Dff * 4 + 2 * D * 4)   # big temporaries
    need += 8 << 20                             # headroom
    cap = 100 << 20
    try:
        # generation-aware: v7x only has 64 MiB VMEM per TensorCore
        cap = int(pltpu.get_tpu_info().vmem_capacity_bytes * 0.85)
    except Exception:
        pass
    return int(min(max(need, 32 << 20), cap))


def run_bert_stack(x, p, *, heads, dim_head, n_valid, out_dtype=jnp.bfloat16):
    B, S, D = x.shape
    L, _, Dff = p["w1"].shape
    HD = heads * dim_head
    # 2-way "parallel" leading slab axis (megacore / v7x dual-TC) when the
    # batch splits evenly; weight HBM traffic is amortized by Bs = B/num_slabs.
    num_slabs = 2 if (B >= 2 and B % 2 == 0) else 1
    Bs = B // num_slabs

    kernel = functools.partial(bert_stack_kernel, heads=heads,
                               dim_head=dim_head, n_valid=n_valid)
    in_specs = [
        pl.BlockSpec((Bs, S, D), lambda s, l: (s, 0, 0)),          # x
        pl.BlockSpec((1, D, 3 * HD), lambda s, l: (l, 0, 0)),      # wqkv
        pl.BlockSpec((1, HD, D), lambda s, l: (l, 0, 0)),          # wo
        pl.BlockSpec((1, D, Dff), lambda s, l: (l, 0, 0)),         # w1
        pl.BlockSpec((1, Dff, D), lambda s, l: (l, 0, 0)),         # w2
        pl.BlockSpec((1, 6, D), lambda s, l: (l, 0, 0)),           # vecs
        pl.BlockSpec((1, 1, Dff), lambda s, l: (l, 0, 0)),         # b1
        pl.BlockSpec((2, D), lambda s, l: (0, 0)),                 # final LN
    ]
    return pl.pallas_call(
        kernel,
        out_shape=jax.ShapeDtypeStruct((B, S, D), out_dtype),
        grid=(num_slabs, L),
        in_specs=in_specs,
        out_specs=pl.BlockSpec((Bs, S, D), lambda s, l: (s, 0, 0)),
        scratch_shapes=[pltpu.VMEM((Bs * S, D), jnp.float32),       # residual
                        pltpu.VMEM((Bs * S, HD), jnp.bfloat16)],    # ctx slab
        compiler_params=pltpu.CompilerParams(
            dimension_semantics=("parallel", "arbitrary"),
            vmem_limit_bytes=_vmem_limit_bytes(Bs, S, D, HD, Dff)),
    )(x, p["wqkv"], p["wo"], p["w1"], p["w2"], p["vecs"], p["b1"], p["norm"])


class BERTEmbedderPallas:
    """Pallas port of BERTEmbedder.forward (the use_tokenizer=False path:
    inputs are pre-tokenized integer ids).

        x = token_emb[tokens] + pos_emb[:S]           # emb_dropout = 0.0
        repeat n_layer:  x += Attn(LN(x)); x += FF(LN(x))
        return LN(x)                                  # return_embeddings=True
    """
    # TODO(synk): BERTTokenizer (HuggingFace BertTokenizerFast string
    # tokenization) has no TPU/Pallas equivalent; this module consumes ids.
    # TODO(synk): the optional fic_module(z, context) hook is not ported
    # (defaults to None in the reference).

    def __init__(self, n_embed, n_layer, vocab_size=30522, max_seq_len=77,
                 heads=8, dim_head=64, ff_mult=4, seed=0,
                 out_dtype=jnp.bfloat16):
        self.heads = heads
        self.dim_head = dim_head
        self.out_dtype = out_dtype
        D, HD, Dff = n_embed, heads * dim_head, n_embed * ff_mult

        def nrm(k, shape, scale=0.02):
            return (scale * jax.random.normal(k, shape)).astype(jnp.float32)

        keys = iter(jax.random.split(jax.random.PRNGKey(seed), 2 + 6 * n_layer))
        self.token_emb = nrm(next(keys), (vocab_size, D))
        self.pos_emb = nrm(next(keys), (max_seq_len, D))

        qscale = dim_head ** -0.5
        wqkv, wo, w1, w2, vecs, b1 = [], [], [], [], [], []
        for _ in range(n_layer):
            wq = nrm(next(keys), (D, HD)) * qscale    # fold 1/sqrt(dh) into q
            wk = nrm(next(keys), (D, HD))
            wv = nrm(next(keys), (D, HD))
            wqkv.append(jnp.concatenate([wq, wk, wv], axis=1))          # (D, 3HD)
            wo.append(nrm(next(keys), (HD, D)))                         # (HD, D)
            w1.append(nrm(next(keys), (D, Dff)))
            w2.append(nrm(next(keys), (Dff, D)))
            vecs.append(jnp.stack([jnp.ones((D,)), jnp.zeros((D,)),     # ln1 g,b
                                   jnp.zeros((D,)),                     # bo
                                   jnp.ones((D,)), jnp.zeros((D,)),     # ln2 g,b
                                   jnp.zeros((D,))]))                   # b2
            b1.append(jnp.zeros((1, Dff), jnp.float32))
        self.params = dict(
            wqkv=jnp.stack(wqkv).astype(jnp.bfloat16),   # (L, D, 3*HD)
            wo=jnp.stack(wo).astype(jnp.bfloat16),       # (L, HD, D)
            w1=jnp.stack(w1).astype(jnp.bfloat16),       # (L, D, Dff)
            w2=jnp.stack(w2).astype(jnp.bfloat16),       # (L, Dff, D)
            vecs=jnp.stack(vecs).astype(jnp.float32),    # (L, 6, D)
            b1=jnp.stack(b1).astype(jnp.float32),        # (L, 1, Dff)
            norm=jnp.stack([jnp.ones((D,)),
                            jnp.zeros((D,))]).astype(jnp.float32),  # (2, D)
        )

    def __call__(self, tokens):
        B, S = tokens.shape
        # glue: embedding gathers in plain JAX
        x = jnp.take(self.token_emb, tokens, axis=0) + self.pos_emb[:S][None]
        S_pad = _pad_seq_len(S)
        if S_pad != S:
            x = jnp.pad(x, ((0, 0), (0, S_pad - S), (0, 0)))
        z = run_bert_stack(x, self.params, heads=self.heads,
                           dim_head=self.dim_head, n_valid=S,
                           out_dtype=self.out_dtype)
        return z[:, :S] if S_pad != S else z


if __name__ == "__main__":
    # small, forward-consistent shapes (seq=12 pads to 16 -> exercises masking;
    # batch=2 -> exercises the 2-way parallel slab axis)
    n_embed, n_layer = 64, 2
    vocab_size, max_seq_len = 128, 16
    batch, seq = 2, 12

    model = BERTEmbedderPallas(n_embed, n_layer, vocab_size=vocab_size,
                               max_seq_len=max_seq_len, heads=4, dim_head=16,
                               ff_mult=4, seed=0)

    tokens = jax.random.randint(jax.random.PRNGKey(0), (batch, seq), 0,
                                vocab_size, dtype=jnp.int32)
    z = model(tokens)
    jax.block_until_ready(z)
    assert z.shape == (batch, seq, n_embed) and z.dtype == jnp.bfloat16
    print("KERNEL_OK")
</pallas_src>

<mosaic_0001>
module attributes {stable_mosaic.version = 11 : i64} {
  func.func @bert_stack_kernel(%arg0: i32, %arg1: i32, %arg2: memref<1x16x64xf32, #tpu.memory_space<vmem>>, %arg3: memref<1x64x192xbf16, #tpu.memory_space<vmem>>, %arg4: memref<1x64x64xbf16, #tpu.memory_space<vmem>>, %arg5: memref<1x64x256xbf16, #tpu.memory_space<vmem>>, %arg6: memref<1x256x64xbf16, #tpu.memory_space<vmem>>, %arg7: memref<1x6x64xf32, #tpu.memory_space<vmem>>, %arg8: memref<1x1x256xf32, #tpu.memory_space<vmem>>, %arg9: memref<2x64xf32, #tpu.memory_space<vmem>>, %arg10: memref<1x16x64xbf16, #tpu.memory_space<vmem>>, %arg11: memref<16x64xf32, #tpu.memory_space<vmem>>, %arg12: memref<16x64xbf16, #tpu.memory_space<vmem>>) attributes {dimension_semantics = [#tpu.dimension_semantics<parallel>, #tpu.dimension_semantics<arbitrary>], iteration_bounds = array<i64: 2, 2>, scalar_prefetch = 0 : i64, scratch_operands = 2 : i64, tpu.core_type = #tpu.core_type<tc>, window_params = [{transform_indices = @transform_0, window_bounds = array<i64: 1, 16, 64>}, {transform_indices = @transform_1, window_bounds = array<i64: 1, 64, 192>}, {transform_indices = @transform_2, window_bounds = array<i64: 1, 64, 64>}, {transform_indices = @transform_3, window_bounds = array<i64: 1, 64, 256>}, {transform_indices = @transform_4, window_bounds = array<i64: 1, 256, 64>}, {transform_indices = @transform_5, window_bounds = array<i64: 1, 6, 64>}, {transform_indices = @transform_6, window_bounds = array<i64: 1, 1, 256>}, {pipeline_mode = #tpu.pipeline_mode<synchronous>, transform_indices = @transform_7, window_bounds = array<i64: 2, 64>}, {transform_indices = @transform_8, window_bounds = array<i64: 1, 16, 64>}]} {
    %c0_i32 = arith.constant 0 : i32
    %0 = arith.cmpi eq, %arg1, %c0_i32 : i32
    %1 = arith.extui %0 : i1 to i32
    %c0_i32_0 = arith.constant 0 : i32
    %2 = arith.cmpi ne, %1, %c0_i32_0 : i32
    scf.if %2 {
      %c0_65 = arith.constant 0 : index
      %c0_66 = arith.constant 0 : index
      %c0_67 = arith.constant 0 : index
      %184 = vector.load %arg2[%c0_65, %c0_66, %c0_67] : memref<1x16x64xf32, #tpu.memory_space<vmem>>, vector<1x16x64xf32>
      %185 = vector.shape_cast %184 : vector<1x16x64xf32> to vector<16x64xf32>
      %c0_68 = arith.constant 0 : index
      %c0_69 = arith.constant 0 : index
      %186 = vector.load %arg11[%c0_68, %c0_69] : memref<16x64xf32, #tpu.memory_space<vmem>>, vector<16x64xf32>
      tpu.vector_store %arg11[%c0_68, %c0_69], %185 {strides = array<i32>} : memref<16x64xf32, #tpu.memory_space<vmem>>, vector<16x64xf32>,
    } else {
    }
    %c0 = arith.constant 0 : index
    %c0_1 = arith.constant 0 : index
    %3 = vector.load %arg11[%c0, %c0_1] : memref<16x64xf32, #tpu.memory_space<vmem>>, vector<16x64xf32>
    %c0_2 = arith.constant 0 : index
    %c0_3 = arith.constant 0 : index
    %c0_4 = arith.constant 0 : index
    %4 = vector.load %arg7[%c0_2, %c0_3, %c0_4] : memref<1x6x64xf32, #tpu.memory_space<vmem>>, vector<1x6x64xf32>
    %5 = vector.shape_cast %4 : vector<1x6x64xf32> to vector<6x64xf32>
    %6 = vector.extract_strided_slice %5 {offsets = [0, 0], sizes = [1, 64], strides = [1, 1]} : vector<6x64xf32> to vector<1x64xf32>
    %7 = vector.extract_strided_slice %5 {offsets = [1, 0], sizes = [1, 64], strides = [1, 1]} : vector<6x64xf32> to vector<1x64xf32>
    %8 = vector.extract_strided_slice %5 {offsets = [2, 0], sizes = [1, 64], strides = [1, 1]} : vector<6x64xf32> to vector<1x64xf32>
    %9 = vector.extract_strided_slice %5 {offsets = [3, 0], sizes = [1, 64], strides = [1, 1]} : vector<6x64xf32> to vector<1x64xf32>
    %10 = vector.extract_strided_slice %5 {offsets = [4, 0], sizes = [1, 64], strides = [1, 1]} : vector<6x64xf32> to vector<1x64xf32>
    %11 = vector.extract_strided_slice %5 {offsets = [5, 0], sizes = [1, 64], strides = [1, 1]} : vector<6x64xf32> to vector<1x64xf32>
    %cst = arith.constant dense<0.000000e+00> : vector<16xf32>
    %12 = vector.multi_reduction <add>, %3, %cst [1] : vector<16x64xf32> to vector<16xf32>
    %13 = vector.shape_cast %12 : vector<16xf32> to vector<16x1xf32>
    %cst_5 = arith.constant 6.400000e+01 : f32
    %14 = vector.broadcast %cst_5 : f32 to vector<16x1xf32>
    %15 = arith.divf %13, %14 : vector<16x1xf32>
    %16 = vector.broadcast %15 : vector<16x1xf32> to vector<16x64xf32>
    %17 = arith.subf %3, %16 : vector<16x64xf32>
    %18 = arith.mulf %17, %17 : vector<16x64xf32>
    %cst_6 = arith.constant dense<0.000000e+00> : vector<16xf32>
    %19 = vector.multi_reduction <add>, %18, %cst_6 [1] : vector<16x64xf32> to vector<16xf32>
    %20 = vector.shape_cast %19 : vector<16xf32> to vector<16x1xf32>
    %cst_7 = arith.constant 6.400000e+01 : f32
    %21 = vector.broadcast %cst_7 : f32 to vector<16x1xf32>
    %22 = arith.divf %20, %21 : vector<16x1xf32>
    %cst_8 = arith.constant 9.99999974E-6 : f32
    %23 = vector.broadcast %cst_8 : f32 to vector<16x1xf32>
    %24 = arith.addf %22, %23 : vector<16x1xf32>
    %25 = math.rsqrt %24 : vector<16x1xf32>
    %26 = vector.broadcast %25 : vector<16x1xf32> to vector<16x64xf32>
    %27 = arith.mulf %17, %26 : vector<16x64xf32>
    %28 = vector.broadcast %6 : vector<1x64xf32> to vector<16x64xf32>
    %29 = arith.mulf %27, %28 : vector<16x64xf32>
    %30 = vector.broadcast %7 : vector<1x64xf32> to vector<16x64xf32>
    %31 = arith.addf %29, %30 : vector<16x64xf32>
    %32 = arith.truncf %31 : vector<16x64xf32> to vector<16x64xbf16>
    %c0_9 = arith.constant 0 : index
    %c0_10 = arith.constant 0 : index
    %c0_11 = arith.constant 0 : index
    %33 = vector.load %arg3[%c0_9, %c0_10, %c0_11] : memref<1x64x192xbf16, #tpu.memory_space<vmem>>, vector<1x64x192xbf16>
    %34 = vector.shape_cast %33 : vector<1x64x192xbf16> to vector<64x192xbf16>
    %cst_12 = arith.constant dense<0.000000e+00> : vector<16x192xf32>
    %35 = tpu.matmul %32, %34, %cst_12 {dimension_numbers = #tpu.dot_dimension_numbers<[1], [0], [0], [1], [0, 0, 1, 1], [], []>} : vector<16x64xbf16>, vector<64x192xbf16>, vector<16x192xf32> -> vector<16x192xf32>
    %36 = arith.truncf %35 : vector<16x192xf32> to vector<16x192xbf16>
    %37 = tpu.iota {dimensions = array<i32: 1>} : vector<1x16xi32>
    %c12_i32 = arith.constant 12 : i32
    %38 = vector.broadcast %c12_i32 : i32 to vector<1x16xi32>
    %39 = arith.cmpi slt, %37, %38 : vector<1x16xi32>
    %cst_13 = arith.constant 0.000000e+00 : f32
    %cst_14 = arith.constant -1.000000e+30 : f32
    %40 = vector.broadcast %cst_13 : f32 to vector<1x16xf32>
    %41 = vector.broadcast %cst_14 : f32 to vector<1x16xf32>
    %42 = arith.select %39, %40, %41 : vector<1x16xi1>, vector<1x16xf32>
    %43 = vector.extract_strided_slice %36 {offsets = [0, 64], sizes = [16, 64], strides = [1, 1]} : vector<16x192xbf16> to vector<16x64xbf16>
    %44 = tpu.transpose %43, [1, 0] : vector<16x64xbf16> -> vector<64x16xbf16>
    %45 = vector.extract_strided_slice %36 {offsets = [0, 0], sizes = [16, 16], strides = [1, 1]} : vector<16x192xbf16> to vector<16x16xbf16>
    %46 = vector.extract_strided_slice %44 {offsets = [0, 0], sizes = [16, 16], strides = [1, 1]} : vector<64x16xbf16> to vector<16x16xbf16>
    %47 = vector.extract_strided_slice %36 {offsets = [0, 128], sizes = [16, 16], strides = [1, 1]} : vector<16x192xbf16> to vector<16x16xbf16>
    %cst_15 = arith.constant dense<0.000000e+00> : vector<16x16xf32>
    %48 = tpu.matmul %45, %46, %cst_15 {dimension_numbers = #tpu.dot_dimension_numbers<[1], [0], [0], [1], [0, 0, 1, 1], [], []>} : vector<16x16xbf16>, vector<16x16xbf16>, vector<16x16xf32> -> vector<16x16xf32>
    %49 = vector.broadcast %42 : vector<1x16xf32> to vector<16x16xf32>
    %50 = arith.addf %48, %49 : vector<16x16xf32>
    %cst_16 = arith.constant dense<0xFF800000> : vector<16xf32>
    %51 = vector.multi_reduction <maximumf>, %50, %cst_16 [1] : vector<16x16xf32> to vector<16xf32>
    %52 = vector.shape_cast %51 : vector<16xf32> to vector<16x1xf32>
    %53 = vector.broadcast %52 : vector<16x1xf32> to vector<16x16xf32>
    %54 = arith.subf %50, %53 : vector<16x16xf32>
    %55 = math.exp %54 : vector<16x16xf32>
    %cst_17 = arith.constant dense<0.000000e+00> : vector<16xf32>
    %56 = vector.multi_reduction <add>, %55, %cst_17 [1] : vector<16x16xf32> to vector<16xf32>
    %57 = vector.shape_cast %56 : vector<16xf32> to vector<16x1xf32>
    %58 = tpu.reciprocal %57 {approx = true} : vector<16x1xf32> -> vector<16x1xf32>
    %59 = vector.broadcast %58 : vector<16x1xf32> to vector<16x16xf32>
    %60 = arith.mulf %55, %59 : vector<16x16xf32>
    %61 = arith.truncf %60 : vector<16x16xf32> to vector<16x16xbf16>
    %cst_18 = arith.constant dense<0.000000e+00> : vector<16x16xf32>
    %62 = tpu.matmul %61, %47, %cst_18 {dimension_numbers = #tpu.dot_dimension_numbers<[1], [0], [0], [1], [0, 0, 1, 1], [], []>} : vector<16x16xbf16>, vector<16x16xbf16>, vector<16x16xf32> -> vector<16x16xf32>
    %63 = arith.truncf %62 : vector<16x16xf32> to vector<16x16xbf16>
    %c0_19 = arith.constant 0 : index
    %c0_20 = arith.constant 0 : index
    %64 = vector.load %arg12[%c0_19, %c0_20] : memref<16x64xbf16, #tpu.memory_space<vmem>>, vector<16x16xbf16>
    tpu.vector_store %arg12[%c0_19, %c0_20], %63 {strides = array<i32>} : memref<16x64xbf16, #tpu.memory_space<vmem>>, vector<16x16xbf16>,
    %65 = vector.extract_strided_slice %36 {offsets = [0, 16], sizes = [16, 16], strides = [1, 1]} : vector<16x192xbf16> to vector<16x16xbf16>
    %66 = vector.extract_strided_slice %44 {offsets = [16, 0], sizes = [16, 16], strides = [1, 1]} : vector<64x16xbf16> to vector<16x16xbf16>
    %67 = vector.extract_strided_slice %36 {offsets = [0, 144], sizes = [16, 16], strides = [1, 1]} : vector<16x192xbf16> to vector<16x16xbf16>
    %cst_21 = arith.constant dense<0.000000e+00> : vector<16x16xf32>
    %68 = tpu.matmul %65, %66, %cst_21 {dimension_numbers = #tpu.dot_dimension_numbers<[1], [0], [0], [1], [0, 0, 1, 1], [], []>} : vector<16x16xbf16>, vector<16x16xbf16>, vector<16x16xf32> -> vector<16x16xf32>
    %69 = vector.broadcast %42 : vector<1x16xf32> to vector<16x16xf32>
    %70 = arith.addf %68, %69 : vector<16x16xf32>
    %cst_22 = arith.constant dense<0xFF800000> : vector<16xf32>
    %71 = vector.multi_reduction <maximumf>, %70, %cst_22 [1] : vector<16x16xf32> to vector<16xf32>
    %72 = vector.shape_cast %71 : vector<16xf32> to vector<16x1xf32>
    %73 = vector.broadcast %72 : vector<16x1xf32> to vector<16x16xf32>
    %74 = arith.subf %70, %73 : vector<16x16xf32>
    %75 = math.exp %74 : vector<16x16xf32>
    %cst_23 = arith.constant dense<0.000000e+00> : vector<16xf32>
    %76 = vector.multi_reduction <add>, %75, %cst_23 [1] : vector<16x16xf32> to vector<16xf32>
    %77 = vector.shape_cast %76 : vector<16xf32> to vector<16x1xf32>
    %78 = tpu.reciprocal %77 {approx = true} : vector<16x1xf32> -> vector<16x1xf32>
    %79 = vector.broadcast %78 : vector<16x1xf32> to vector<16x16xf32>
    %80 = arith.mulf %75, %79 : vector<16x16xf32>
    %81 = arith.truncf %80 : vector<16x16xf32> to vector<16x16xbf16>
    %cst_24 = arith.constant dense<0.000000e+00> : vector<16x16xf32>
    %82 = tpu.matmul %81, %67, %cst_24 {dimension_numbers = #tpu.dot_dimension_numbers<[1], [0], [0], [1], [0, 0, 1, 1], [], []>} : vector<16x16xbf16>, vector<16x16xbf16>, vector<16x16xf32> -> vector<16x16xf32>
    %83 = arith.truncf %82 : vector<16x16xf32> to vector<16x16xbf16>
    %c0_25 = arith.constant 0 : index
    %c16 = arith.constant 16 : index
    %84 = vector.load %arg12[%c0_25, %c16] : memref<16x64xbf16, #tpu.memory_space<vmem>>, vector<16x16xbf16>
    tpu.vector_store %arg12[%c0_25, %c16], %83 {strides = array<i32>} : memref<16x64xbf16, #tpu.memory_space<vmem>>, vector<16x16xbf16>,
    %85 = vector.extract_strided_slice %36 {offsets = [0, 32], sizes = [16, 16], strides = [1, 1]} : vector<16x192xbf16> to vector<16x16xbf16>
    %86 = vector.extract_strided_slice %44 {offsets = [32, 0], sizes = [16, 16], strides = [1, 1]} : vector<64x16xbf16> to vector<16x16xbf16>
    %87 = vector.extract_strided_slice %36 {offsets = [0, 160], sizes = [16, 16], strides = [1, 1]} : vector<16x192xbf16> to vector<16x16xbf16>
    %cst_26 = arith.constant dense<0.000000e+00> : vector<16x16xf32>
    %88 = tpu.matmul %85, %86, %cst_26 {dimension_numbers = #tpu.dot_dimension_numbers<[1], [0], [0], [1], [0, 0, 1, 1], [], []>} : vector<16x16xbf16>, vector<16x16xbf16>, vector<16x16xf32> -> vector<16x16xf32>
    %89 = vector.broadcast %42 : vector<1x16xf32> to vector<16x16xf32>
    %90 = arith.addf %88, %89 : vector<16x16xf32>
    %cst_27 = arith.constant dense<0xFF800000> : vector<16xf32>
    %91 = vector.multi_reduction <maximumf>, %90, %cst_27 [1] : vector<16x16xf32> to vector<16xf32>
    %92 = vector.shape_cast %91 : vector<16xf32> to vector<16x1xf32>
    %93 = vector.broadcast %92 : vector<16x1xf32> to vector<16x16xf32>
    %94 = arith.subf %90, %93 : vector<16x16xf32>
    %95 = math.exp %94 : vector<16x16xf32>
    %cst_28 = arith.constant dense<0.000000e+00> : vector<16xf32>
    %96 = vector.multi_reduction <add>, %95, %cst_28 [1] : vector<16x16xf32> to vector<16xf32>
    %97 = vector.shape_cast %96 : vector<16xf32> to vector<16x1xf32>
    %98 = tpu.reciprocal %97 {approx = true} : vector<16x1xf32> -> vector<16x1xf32>
    %99 = vector.broadcast %98 : vector<16x1xf32> to vector<16x16xf32>
    %100 = arith.mulf %95, %99 : vector<16x16xf32>
    %101 = arith.truncf %100 : vector<16x16xf32> to vector<16x16xbf16>
    %cst_29 = arith.constant dense<0.000000e+00> : vector<16x16xf32>
    %102 = tpu.matmul %101, %87, %cst_29 {dimension_numbers = #tpu.dot_dimension_numbers<[1], [0], [0], [1], [0, 0, 1, 1], [], []>} : vector<16x16xbf16>, vector<16x16xbf16>, vector<16x16xf32> -> vector<16x16xf32>
    %103 = arith.truncf %102 : vector<16x16xf32> to vector<16x16xbf16>
    %c0_30 = arith.constant 0 : index
    %c32 = arith.constant 32 : index
    %104 = vector.load %arg12[%c0_30, %c32] : memref<16x64xbf16, #tpu.memory_space<vmem>>, vector<16x16xbf16>
    tpu.vector_store %arg12[%c0_30, %c32], %103 {strides = array<i32>} : memref<16x64xbf16, #tpu.memory_space<vmem>>, vector<16x16xbf16>,
    %105 = vector.extract_strided_slice %36 {offsets = [0, 48], sizes = [16, 16], strides = [1, 1]} : vector<16x192xbf16> to vector<16x16xbf16>
    %106 = vector.extract_strided_slice %44 {offsets = [48, 0], sizes = [16, 16], strides = [1, 1]} : vector<64x16xbf16> to vector<16x16xbf16>
    %107 = vector.extract_strided_slice %36 {offsets = [0, 176], sizes = [16, 16], strides = [1, 1]} : vector<16x192xbf16> to vector<16x16xbf16>
    %cst_31 = arith.constant dense<0.000000e+00> : vector<16x16xf32>
    %108 = tpu.matmul %105, %106, %cst_31 {dimension_numbers = #tpu.dot_dimension_numbers<[1], [0], [0], [1], [0, 0, 1, 1], [], []>} : vector<16x16xbf16>, vector<16x16xbf16>, vector<16x16xf32> -> vector<16x16xf32>
    %109 = vector.broadcast %42 : vector<1x16xf32> to vector<16x16xf32>
    %110 = arith.addf %108, %109 : vector<16x16xf32>
    %cst_32 = arith.constant dense<0xFF800000> : vector<16xf32>
    %111 = vector.multi_reduction <maximumf>, %110, %cst_32 [1] : vector<16x16xf32> to vector<16xf32>
    %112 = vector.shape_cast %111 : vector<16xf32> to vector<16x1xf32>
    %113 = vector.broadcast %112 : vector<16x1xf32> to vector<16x16xf32>
    %114 = arith.subf %110, %113 : vector<16x16xf32>
    %115 = math.exp %114 : vector<16x16xf32>
    %cst_33 = arith.constant dense<0.000000e+00> : vector<16xf32>
    %116 = vector.multi_reduction <add>, %115, %cst_33 [1] : vector<16x16xf32> to vector<16xf32>
    %117 = vector.shape_cast %116 : vector<16xf32> to vector<16x1xf32>
    %118 = tpu.reciprocal %117 {approx = true} : vector<16x1xf32> -> vector<16x1xf32>
    %119 = vector.broadcast %118 : vector<16x1xf32> to vector<16x16xf32>
    %120 = arith.mulf %115, %119 : vector<16x16xf32>
    %121 = arith.truncf %120 : vector<16x16xf32> to vector<16x16xbf16>
    %cst_34 = arith.constant dense<0.000000e+00> : vector<16x16xf32>
    %122 = tpu.matmul %121, %107, %cst_34 {dimension_numbers = #tpu.dot_dimension_numbers<[1], [0], [0], [1], [0, 0, 1, 1], [], []>} : vector<16x16xbf16>, vector<16x16xbf16>, vector<16x16xf32> -> vector<16x16xf32>
    %123 = arith.truncf %122 : vector<16x16xf32> to vector<16x16xbf16>
    %c0_35 = arith.constant 0 : index
    %c48 = arith.constant 48 : index
    %124 = vector.load %arg12[%c0_35, %c48] : memref<16x64xbf16, #tpu.memory_space<vmem>>, vector<16x16xbf16>
    tpu.vector_store %arg12[%c0_35, %c48], %123 {strides = array<i32>} : memref<16x64xbf16, #tpu.memory_space<vmem>>, vector<16x16xbf16>,
    %c0_36 = arith.constant 0 : index
    %c0_37 = arith.constant 0 : index
    %125 = vector.load %arg12[%c0_36, %c0_37] : memref<16x64xbf16, #tpu.memory_space<vmem>>, vector<16x64xbf16>
    %c0_38 = arith.constant 0 : index
    %c0_39 = arith.constant 0 : index
    %c0_40 = arith.constant 0 : index
    %126 = vector.load %arg4[%c0_38, %c0_39, %c0_40] : memref<1x64x64xbf16, #tpu.memory_space<vmem>>, vector<1x64x64xbf16>
    %127 = vector.shape_cast %126 : vector<1x64x64xbf16> to vector<64x64xbf16>
    %cst_41 = arith.constant dense<0.000000e+00> : vector<16x64xf32>
    %128 = tpu.matmul %125, %127, %cst_41 {dimension_numbers = #tpu.dot_dimension_numbers<[1], [0], [0], [1], [0, 0, 1, 1], [], []>} : vector<16x64xbf16>, vector<64x64xbf16>, vector<16x64xf32> -> vector<16x64xf32>
    %129 = arith.addf %3, %128 : vector<16x64xf32>
    %130 = vector.broadcast %8 : vector<1x64xf32> to vector<16x64xf32>
    %131 = arith.addf %129, %130 : vector<16x64xf32>
    %cst_42 = arith.constant dense<0.000000e+00> : vector<16xf32>
    %132 = vector.multi_reduction <add>, %131, %cst_42 [1] : vector<16x64xf32> to vector<16xf32>
    %133 = vector.shape_cast %132 : vector<16xf32> to vector<16x1xf32>
    %cst_43 = arith.constant 6.400000e+01 : f32
    %134 = vector.broadcast %cst_43 : f32 to vector<16x1xf32>
    %135 = arith.divf %133, %134 : vector<16x1xf32>
    %136 = vector.broadcast %135 : vector<16x1xf32> to vector<16x64xf32>
    %137 = arith.subf %131, %136 : vector<16x64xf32>
    %138 = arith.mulf %137, %137 : vector<16x64xf32>
    %cst_44 = arith.constant dense<0.000000e+00> : vector<16xf32>
    %139 = vector.multi_reduction <add>, %138, %cst_44 [1] : vector<16x64xf32> to vector<16xf32>
    %140 = vector.shape_cast %139 : vector<16xf32> to vector<16x1xf32>
    %cst_45 = arith.constant 6.400000e+01 : f32
    %141 = vector.broadcast %cst_45 : f32 to vector<16x1xf32>
    %142 = arith.divf %140, %141 : vector<16x1xf32>
    %cst_46 = arith.constant 9.99999974E-6 : f32
    %143 = vector.broadcast %cst_46 : f32 to vector<16x1xf32>
    %144 = arith.addf %142, %143 : vector<16x1xf32>
    %145 = math.rsqrt %144 : vector<16x1xf32>
    %146 = vector.broadcast %145 : vector<16x1xf32> to vector<16x64xf32>
    %147 = arith.mulf %137, %146 : vector<16x64xf32>
    %148 = vector.broadcast %9 : vector<1x64xf32> to vector<16x64xf32>
    %149 = arith.mulf %147, %148 : vector<16x64xf32>
    %150 = vector.broadcast %10 : vector<1x64xf32> to vector<16x64xf32>
    %151 = arith.addf %149, %150 : vector<16x64xf32>
    %152 = arith.truncf %151 : vector<16x64xf32> to vector<16x64xbf16>
    %c0_47 = arith.constant 0 : index
    %c0_48 = arith.constant 0 : index
    %c0_49 = arith.constant 0 : index
    %153 = vector.load %arg5[%c0_47, %c0_48, %c0_49] : memref<1x64x256xbf16, #tpu.memory_space<vmem>>, vector<1x64x256xbf16>
    %154 = vector.shape_cast %153 : vector<1x64x256xbf16> to vector<64x256xbf16>
    %cst_50 = arith.constant dense<0.000000e+00> : vector<16x256xf32>
    %155 = tpu.matmul %152, %154, %cst_50 {dimension_numbers = #tpu.dot_dimension_numbers<[1], [0], [0], [1], [0, 0, 1, 1], [], []>} : vector<16x64xbf16>, vector<64x256xbf16>, vector<16x256xf32> -> vector<16x256xf32>
    %c0_51 = arith.constant 0 : index
    %c0_52 = arith.constant 0 : index
    %c0_53 = arith.constant 0 : index
    %156 = vector.load %arg8[%c0_51, %c0_52, %c0_53] : memref<1x1x256xf32, #tpu.memory_space<vmem>>, vector<1x1x256xf32>
    %157 = vector.shape_cast %156 : vector<1x1x256xf32> to vector<1x256xf32>
    %158 = vector.broadcast %157 : vector<1x256xf32> to vector<16x256xf32>
    %159 = arith.addf %155, %158 : vector<16x256xf32>
    %160 = arith.mulf %159, %159 : vector<16x256xf32>
    %161 = arith.mulf %159, %160 : vector<16x256xf32>
    %cst_54 = arith.constant 4.471500e-02 : f32
    %162 = vector.broadcast %cst_54 : f32 to vector<16x256xf32>
    %163 = arith.mulf %162, %161 : vector<16x256xf32>
    %164 = arith.addf %159, %163 : vector<16x256xf32>
    %cst_55 = arith.constant 0.797884583 : f32
    %165 = vector.broadcast %cst_55 : f32 to vector<16x256xf32>
    %166 = arith.mulf %165, %164 : vector<16x256xf32>
    %167 = math.tanh %166 : vector<16x256xf32>
    %cst_56 = arith.constant 1.000000e+00 : f32
    %168 = vector.broadcast %cst_56 : f32 to vector<16x256xf32>
    %169 = arith.addf %168, %167 : vector<16x256xf32>
    %cst_57 = arith.constant 5.000000e-01 : f32
    %170 = vector.broadcast %cst_57 : f32 to vector<16x256xf32>
    %171 = arith.mulf %170, %169 : vector<16x256xf32>
    %172 = arith.mulf %159, %171 : vector<16x256xf32>
    %173 = arith.truncf %172 : vector<16x256xf32> to vector<16x256xbf16>
    %c0_58 = arith.constant 0 : index
    %c0_59 = arith.constant 0 : index
    %c0_60 = arith.constant 0 : index
    %174 = vector.load %arg6[%c0_58, %c0_59, %c0_60] : memref<1x256x64xbf16, #tpu.memory_space<vmem>>, vector<1x256x64xbf16>
    %175 = vector.shape_cast %174 : vector<1x256x64xbf16> to vector<256x64xbf16>
    %cst_61 = arith.constant dense<0.000000e+00> : vector<16x64xf32>
    %176 = tpu.matmul %173, %175, %cst_61 {dimension_numbers = #tpu.dot_dimension_numbers<[1], [0], [0], [1], [0, 0, 1, 1], [], []>} : vector<16x256xbf16>, vector<256x64xbf16>, vector<16x64xf32> -> vector<16x64xf32>
    %177 = arith.addf %131, %176 : vector<16x64xf32>
    %178 = vector.broadcast %11 : vector<1x64xf32> to vector<16x64xf32>
    %179 = arith.addf %177, %178 : vector<16x64xf32>
    %c0_62 = arith.constant 0 : index
    %c0_63 = arith.constant 0 : index
    %180 = vector.load %arg11[%c0_62, %c0_63] : memref<16x64xf32, #tpu.memory_space<vmem>>, vector<16x64xf32>
    tpu.vector_store %arg11[%c0_62, %c0_63], %179 {strides = array<i32>} : memref<16x64xf32, #tpu.memory_space<vmem>>, vector<16x64xf32>,
    %c1_i32 = arith.constant 1 : i32
    %181 = arith.cmpi eq, %arg1, %c1_i32 : i32
    %182 = arith.extui %181 : i1 to i32
    %c0_i32_64 = arith.constant 0 : i32
    %183 = arith.cmpi ne, %182, %c0_i32_64 : i32
    scf.if %183 {
      %c0_65 = arith.constant 0 : index
      %c0_66 = arith.constant 0 : index
      %184 = vector.load %arg9[%c0_65, %c0_66] : memref<2x64xf32, #tpu.memory_space<vmem>>, vector<1x64xf32>
      %c1 = arith.constant 1 : index
      %c0_67 = arith.constant 0 : index
      %185 = vector.load %arg9[%c1, %c0_67] : memref<2x64xf32, #tpu.memory_space<vmem>>, vector<1x64xf32>
      %cst_68 = arith.constant dense<0.000000e+00> : vector<16xf32>
      %186 = vector.multi_reduction <add>, %179, %cst_68 [1] : vector<16x64xf32> to vector<16xf32>
      %187 = vector.shape_cast %186 : vector<16xf32> to vector<16x1xf32>
      %cst_69 = arith.constant 6.400000e+01 : f32
      %188 = vector.broadcast %cst_69 : f32 to vector<16x1xf32>
      %189 = arith.divf %187, %188 : vector<16x1xf32>
      %190 = vector.broadcast %189 : vector<16x1xf32> to vector<16x64xf32>
      %191 = arith.subf %179, %190 : vector<16x64xf32>
      %192 = arith.mulf %191, %191 : vector<16x64xf32>
      %cst_70 = arith.constant dense<0.000000e+00> : vector<16xf32>
      %193 = vector.multi_reduction <add>, %192, %cst_70 [1] : vector<16x64xf32> to vector<16xf32>
      %194 = vector.shape_cast %193 : vector<16xf32> to vector<16x1xf32>
      %cst_71 = arith.constant 6.400000e+01 : f32
      %195 = vector.broadcast %cst_71 : f32 to vector<16x1xf32>
      %196 = arith.divf %194, %195 : vector<16x1xf32>
      %cst_72 = arith.constant 9.99999974E-6 : f32
      %197 = vector.broadcast %cst_72 : f32 to vector<16x1xf32>
      %198 = arith.addf %196, %197 : vector<16x1xf32>
      %199 = math.rsqrt %198 : vector<16x1xf32>
      %200 = vector.broadcast %199 : vector<16x1xf32> to vector<16x64xf32>
      %201 = arith.mulf %191, %200 : vector<16x64xf32>
      %202 = vector.broadcast %184 : vector<1x64xf32> to vector<16x64xf32>
      %203 = arith.mulf %201, %202 : vector<16x64xf32>
      %204 = vector.broadcast %185 : vector<1x64xf32> to vector<16x64xf32>
      %205 = arith.addf %203, %204 : vector<16x64xf32>
      %206 = arith.truncf %205 : vector<16x64xf32> to vector<16x64xbf16>
      %c0_73 = arith.constant 0 : index
      %c0_74 = arith.constant 0 : index
      %c0_75 = arith.constant 0 : index
      %207 = vector.load %arg10[%c0_73, %c0_74, %c0_75] : memref<1x16x64xbf16, #tpu.memory_space<vmem>>, vector<1x16x64xbf16>
      %208 = vector.shape_cast %207 : vector<1x16x64xbf16> to vector<16x64xbf16>
      %209 = vector.shape_cast %206 : vector<16x64xbf16> to vector<1x16x64xbf16>
      tpu.vector_store %arg10[%c0_73, %c0_74, %c0_75], %209 {strides = array<i32>} : memref<1x16x64xbf16, #tpu.memory_space<vmem>>, vector<1x16x64xbf16>,
    } else {
    }
    return
  }
  func.func @transform_0(%arg0: i32, %arg1: i32) -> (i32, i32, i32) {
    %c0_i32 = arith.constant 0 : i32
    %c0_i32_0 = arith.constant 0 : i32
    %c0_i32_1 = arith.constant 0 : i32
    return %arg0, %c0_i32, %c0_i32_0 : i32, i32, i32
  }
  func.func @transform_1(%arg0: i32, %arg1: i32) -> (i32, i32, i32) {
    %c0_i32 = arith.constant 0 : i32
    %c0_i32_0 = arith.constant 0 : i32
    %c0_i32_1 = arith.constant 0 : i32
    return %arg1, %c0_i32, %c0_i32_0 : i32, i32, i32
  }
  func.func @transform_2(%arg0: i32, %arg1: i32) -> (i32, i32, i32) {
    %c0_i32 = arith.constant 0 : i32
    %c0_i32_0 = arith.constant 0 : i32
    %c0_i32_1 = arith.constant 0 : i32
    return %arg1, %c0_i32, %c0_i32_0 : i32, i32, i32
  }
  func.func @transform_3(%arg0: i32, %arg1: i32) -> (i32, i32, i32) {
    %c0_i32 = arith.constant 0 : i32
    %c0_i32_0 = arith.constant 0 : i32
    %c0_i32_1 = arith.constant 0 : i32
    return %arg1, %c0_i32, %c0_i32_0 : i32, i32, i32
  }
  func.func @transform_4(%arg0: i32, %arg1: i32) -> (i32, i32, i32) {
    %c0_i32 = arith.constant 0 : i32
    %c0_i32_0 = arith.constant 0 : i32
    %c0_i32_1 = arith.constant 0 : i32
    return %arg1, %c0_i32, %c0_i32_0 : i32, i32, i32
  }
  func.func @transform_5(%arg0: i32, %arg1: i32) -> (i32, i32, i32) {
    %c0_i32 = arith.constant 0 : i32
    %c0_i32_0 = arith.constant 0 : i32
    %c0_i32_1 = arith.constant 0 : i32
    return %arg1, %c0_i32, %c0_i32_0 : i32, i32, i32
  }
  func.func @transform_6(%arg0: i32, %arg1: i32) -> (i32, i32, i32) {
    %c0_i32 = arith.constant 0 : i32
    %c0_i32_0 = arith.constant 0 : i32
    %c0_i32_1 = arith.constant 0 : i32
    return %arg1, %c0_i32, %c0_i32_0 : i32, i32, i32
  }
  func.func @transform_7(%arg0: i32, %arg1: i32) -> (i32, i32) {
    %c0_i32 = arith.constant 0 : i32
    %c0_i32_0 = arith.constant 0 : i32
    %c0_i32_1 = arith.constant 0 : i32
    return %c0_i32, %c0_i32_0 : i32, i32
  }
  func.func @transform_8(%arg0: i32, %arg1: i32) -> (i32, i32, i32) {
    %c0_i32 = arith.constant 0 : i32
    %c0_i32_0 = arith.constant 0 : i32
    %c0_i32_1 = arith.constant 0 : i32
    return %arg0, %c0_i32, %c0_i32_0 : i32, i32, i32
  }
}

</mosaic_0001>

<llo_original>
// kernel: tpu_custom_call.1
$region0: #{tpu_custom_call.1}
  #allocation0 [shape = 'u32[]', space=smem, size = 0x4, offset = 0x4, fixed_abs, tag = 'smem constant byte address 0x4 - core index']
  #allocation1 [shape = 'u32[144,128]{1,0:T(1,128)}', space=vmem, size = 0x12000, scoped, tag = 'internal scratch']
  #allocation2 [shape = 'f32[16,64]{1,0:T(8,128)}', space=vmem, size = 0x2000, scoped, tag = 'scratch operand']
  #allocation3 [shape = 'bf16[16,64]{1,0:T(8,128)(2,1)}', space=vmem, size = 0x1000, scoped, tag = 'scratch operand']
  %s0 = inlined_call_operand.vmem [shape: f32[2,16,64], index: 0, kind: input, shape index: {}]
  %s1 = inlined_call_operand.vmem [shape: bf16[2,64,192], index: 1, kind: input, shape index: {}]
  %s2 = inlined_call_operand.vmem [shape: bf16[2,64,64], index: 2, kind: input, shape index: {}]
  %s3 = inlined_call_operand.vmem [shape: bf16[2,64,256], index: 3, kind: input, shape index: {}]
  %s4 = inlined_call_operand.vmem [shape: bf16[2,256,64], index: 4, kind: input, shape index: {}]
  %s5 = inlined_call_operand.vmem [shape: f32[2,6,64], index: 5, kind: input, shape index: {}]
  %s6 = inlined_call_operand.vmem [shape: f32[2,1,256], index: 6, kind: input, shape index: {}]
  %s7 = inlined_call_operand.vmem [shape: f32[2,64], index: 7, kind: input, shape index: {}]
  %s8 = inlined_call_operand.hbm [shape: bf16[2,16,64], index: 8, kind: output, shape index: {}]
  %s9 = sld [smem:[#allocation0]]
  $region73: #{tpu_custom_call.1} parent=0
    _
  %s11 = ssub.s32 1, %s9
  %s12 = scalar_select 0, %s11, %s9
  $region1: #{tpu_custom_call.1} parent=0
    #allocation4 [shape = 'u8[8192]{0}', space=vmem, size = 0x2000, scoped, tag = 'output window, operand 0']
    #allocation5 [shape = 's32[2]{0}', space=sflag, size = 0x8, scoped, tag = 'scoped memory for tpu_custom_call.1']
    %13 = vsyncpa [#allocation5], 0
    %s14 = scalar_lea.sflag [#allocation5], 1
    %15 = vsyncpa %s14, 0
    loop: start=0, step=1, limit=6
    $region2: #{tpu_custom_call.1} parent=1 // loop_pre_header
      _
    $region3: #{tpu_custom_call.1} parent=1 // loop_header
      %s17 = sphi 0, %s21
      %p18 = scmp.ge.s32.totalorder %s17, 6
      %s24 = sphi 0, %s36
      %s25 = sphi 0, %s32
      %s26 = sphi 0, %s24
      %s27 = sphi 0, %s25
      %s28 = sphi 0, %s26
      %s29 = sphi 0, %s27
      %s39 = sphi 0, %s41
      %s42 = sphi 0, %s39
      %s43 = sphi 0, %s42
      %s59 = sphi 0, %s43
      %s65 = sphi 0, %s67
      %s68 = sphi 0, %s65
      %s69 = sphi 0, %s68
      %s85 = sphi 0, %s69
      %s91 = sphi 0, %s93
      %s94 = sphi 0, %s91
      %s95 = sphi 0, %s94
      %s111 = sphi 0, %s95
      %s117 = sphi 0, %s119
      %s120 = sphi 0, %s117
      %s121 = sphi 0, %s120
      %s137 = sphi 0, %s121
      %s143 = sphi 0, %s145
      %s146 = sphi 0, %s143
      %s147 = sphi 0, %s146
      %s163 = sphi 0, %s147
      %s169 = sphi 0, %s171
      %s172 = sphi 0, %s169
      %s173 = sphi 0, %s172
      %s189 = sphi 0, %s173
      %s195 = sphi 0, %s197
      %s198 = sphi 0, %s195
      %s199 = sphi 0, %s198
      %s215 = sphi 0, %s199
      %s219 = sphi 0, %s219
      %s221 = sphi 0, %s219
      %s222 = sphi 0, %s221
      %s236 = sphi 0, %s222
      %s242 = sphi 0, %s244
      %s245 = sphi 0, %s242
      %s246 = sphi 0, %s245
      %s262 = sphi 0, %s246
    $region4: #{tpu_custom_call.1} parent=1 // loop_header_branch
      %20 = sbr.rel (%p18) target = $region8
    $region5: #{tpu_custom_call.1} parent=1 // loop_body
      %s22 = ssub.s32 %s17, 1
      %s23 = ssub.s32 %s17, 2
      %s30 = sadd.s32 1, %s25
      %p31 = scmp.ge.s32.totalorder %s30, 2
      %s32 = scalar_select %p31, 0, %s30
      %s33 = sadd.s32 1, %s24
      %s34 = scalar_select %p31, %s33, %s24
      %p35 = scmp.ge.s32.totalorder %s34, 2
      %s36 = scalar_select %p35, 0, %s34
      %s37 = ssub.s32 %s24, %s36
      %p38 = scmp.eq.s32.totalorder %s37, 0
      %s40 = sadd.s32 %s39, 1
      %s41 = scalar_select %p38, %s39, %s40
      %p44 = pneg %p38
      %p45 = scmp.eq.s32.totalorder %s17, 3
      %p46 = por %p44, %p45
      %p47 = scmp.ne.s32.totalorder %s39, %s42
      %p48 = scmp.eq.s32.totalorder %s17, 0
      %p49 = por %p47, %p48
      %p50 = scmp.ne.s32.totalorder %s39, %s42
      %p51 = scmp.eq.s32.totalorder %s22, 3
      %p52 = por %p50, %p51
      %p53 = scmp.ne.s32.totalorder %s42, %s43
      %p54 = scmp.eq.s32.totalorder %s22, 0
      %p55 = por %p53, %p54
      %p56 = scmp.ne.s32.totalorder %s42, %s43
      %p57 = scmp.eq.s32.totalorder %s23, 3
      %p58 = por %p56, %p57
      %p60 = scmp.ne.s32.totalorder %s43, %s59
      %p61 = scmp.eq.s32.totalorder %s23, 0
      %p62 = por %p60, %p61
      %s63 = ssub.s32 %s25, %s32
      %p64 = scmp.eq.s32.totalorder %s63, 0
      %s66 = sadd.s32 %s65, 1
      %s67 = scalar_select %p64, %s65, %s66
      %p70 = pneg %p64
      %p71 = scmp.eq.s32.totalorder %s17, 3
      %p72 = por %p70, %p71
      %p73 = scmp.ne.s32.totalorder %s65, %s68
      %p74 = scmp.eq.s32.totalorder %s17, 0
      %p75 = por %p73, %p74
      %p76 = scmp.ne.s32.totalorder %s65, %s68
      %p77 = scmp.eq.s32.totalorder %s22, 3
      %p78 = por %p76, %p77
      %p79 = scmp.ne.s32.totalorder %s68, %s69
      %p80 = scmp.eq.s32.totalorder %s22, 0
      %p81 = por %p79, %p80
      %p82 = scmp.ne.s32.totalorder %s68, %s69
      %p83 = scmp.eq.s32.totalorder %s23, 3
      %p84 = por %p82, %p83
      %p86 = scmp.ne.s32.totalorder %s69, %s85
      %p87 = scmp.eq.s32.totalorder %s23, 0
      %p88 = por %p86, %p87
      %s89 = ssub.s32 %s25, %s32
      %p90 = scmp.eq.s32.totalorder %s89, 0
      %s92 = sadd.s32 %s91, 1
      %s93 = scalar_select %p90, %s91, %s92
      %p96 = pneg %p90
      %p97 = scmp.eq.s32.totalorder %s17, 3
      %p98 = por %p96, %p97
      %p99 = scmp.ne.s32.totalorder %s91, %s94
      %p100 = scmp.eq.s32.totalorder %s17, 0
      %p101 = por %p99, %p100
      %p102 = scmp.ne.s32.totalorder %s91, %s94
      %p103 = scmp.eq.s32.totalorder %s22, 3
      %p104 = por %p102, %p103
      %p105 = scmp.ne.s32.totalorder %s94, %s95
      %p106 = scmp.eq.s32.totalorder %s22, 0
      %p107 = por %p105, %p106
      %p108 = scmp.ne.s32.totalorder %s94, %s95
      %p109 = scmp.eq.s32.totalorder %s23, 3
      %p110 = por %p108, %p109
      %p112 = scmp.ne.s32.totalorder %s95, %s111
      %p113 = scmp.eq.s32.totalorder %s23, 0
      %p114 = por %p112, %p113
      %s115 = ssub.s32 %s25, %s32
      %p116 = scmp.eq.s32.totalorder %s115, 0
      %s118 = sadd.s32 %s117, 1
      %s119 = scalar_select %p116, %s117, %s118
      %p122 = pneg %p116
      %p123 = scmp.eq.s32.totalorder %s17, 3
      %p124 = por %p122, %p123
      %p125 = scmp.ne.s32.totalorder %s117, %s120
      %p126 = scmp.eq.s32.totalorder %s17, 0
      %p127 = por %p125, %p126
      %p128 = scmp.ne.s32.totalorder %s117, %s120
      %p129 = scmp.eq.s32.totalorder %s22, 3
      %p130 = por %p128, %p129
      %p131 = scmp.ne.s32.totalorder %s120, %s121
      %p132 = scmp.eq.s32.totalorder %s22, 0
      %p133 = por %p131, %p132
      %p134 = scmp.ne.s32.totalorder %s120, %s121
      %p135 = scmp.eq.s32.totalorder %s23, 3
      %p136 = por %p134, %p135
      %p138 = scmp.ne.s32.totalorder %s121, %s137
      %p139 = scmp.eq.s32.totalorder %s23, 0
      %p140 = por %p138, %p139
      %s141 = ssub.s32 %s25, %s32
      %p142 = scmp.eq.s32.totalorder %s141, 0
      %s144 = sadd.s32 %s143, 1
      %s145 = scalar_select %p142, %s143, %s144
      %p148 = pneg %p142
      %p149 = scmp.eq.s32.totalorder %s17, 3
      %p150 = por %p148, %p149
      %p151 = scmp.ne.s32.totalorder %s143, %s146
      %p152 = scmp.eq.s32.totalorder %s17, 0
      %p153 = por %p151, %p152
      %p154 = scmp.ne.s32.totalorder %s143, %s146
      %p155 = scmp.eq.s32.totalorder %s22, 3
      %p156 = por %p154, %p155
      %p157 = scmp.ne.s32.totalorder %s146, %s147
      %p158 = scmp.eq.s32.totalorder %s22, 0
      %p159 = por %p157, %p158
      %p160 = scmp.ne.s32.totalorder %s146, %s147
      %p161 = scmp.eq.s32.totalorder %s23, 3
      %p162 = por %p160, %p161
      %p164 = scmp.ne.s32.totalorder %s147, %s163
      %p165 = scmp.eq.s32.totalorder %s23, 0
      %p166 = por %p164, %p165
      %s167 = ssub.s32 %s25, %s32
      %p168 = scmp.eq.s32.totalorder %s167, 0
      %s170 = sadd.s32 %s169, 1
      %s171 = scalar_select %p168, %s169, %s170
      %p174 = pneg %p168
      %p175 = scmp.eq.s32.totalorder %s17, 3
      %p176 = por %p174, %p175
      %p177 = scmp.ne.s32.totalorder %s169, %s172
      %p178 = scmp.eq.s32.totalorder %s17, 0
      %p179 = por %p177, %p178
      %p180 = scmp.ne.s32.totalorder %s169, %s172
      %p181 = scmp.eq.s32.totalorder %s22, 3
      %p182 = por %p180, %p181
      %p183 = scmp.ne.s32.totalorder %s172, %s173
      %p184 = scmp.eq.s32.totalorder %s22, 0
      %p185 = por %p183, %p184
      %p186 = scmp.ne.s32.totalorder %s172, %s173
      %p187 = scmp.eq.s32.totalorder %s23, 3
      %p188 = por %p186, %p187
      %p190 = scmp.ne.s32.totalorder %s173, %s189
      %p191 = scmp.eq.s32.totalorder %s23, 0
      %p192 = por %p190, %p191
      %s193 = ssub.s32 %s25, %s32
      %p194 = scmp.eq.s32.totalorder %s193, 0
      %s196 = sadd.s32 %s195, 1
      %s197 = scalar_select %p194, %s195, %s196
      %p200 = pneg %p194
      %p201 = scmp.eq.s32.totalorder %s17, 3
      %p202 = por %p200, %p201
      %p203 = scmp.ne.s32.totalorder %s195, %s198
      %p204 = scmp.eq.s32.totalorder %s17, 0
      %p205 = por %p203, %p204
      %p206 = scmp.ne.s32.totalorder %s195, %s198
      %p207 = scmp.eq.s32.totalorder %s22, 3
      %p208 = por %p206, %p207
      %p209 = scmp.ne.s32.totalorder %s198, %s199
      %p210 = scmp.eq.s32.totalorder %s22, 0
      %p211 = por %p209, %p210
      %p212 = scmp.ne.s32.totalorder %s198, %s199
      %p213 = scmp.eq.s32.totalorder %s23, 3
      %p214 = por %p212, %p213
      %p216 = scmp.ne.s32.totalorder %s199, %s215
      %p217 = scmp.eq.s32.totalorder %s23, 0
      %p218 = por %p216, %p217
      %s220 = sadd.s32 %s219, 1
      %p223 = scmp.eq.s32.totalorder %s17, 3
      %p224 = scmp.ne.s32.totalorder %s219, %s221
      %p225 = scmp.eq.s32.totalorder %s17, 0
      %p226 = por %p224, %p225
      %p227 = scmp.ne.s32.totalorder %s219, %s221
      %p228 = scmp.eq.s32.totalorder %s22, 3
      %p229 = por %p227, %p228
      %p230 = scmp.ne.s32.totalorder %s221, %s222
      %p231 = scmp.eq.s32.totalorder %s22, 0
      %p232 = por %p230, %p231
      %p233 = scmp.ne.s32.totalorder %s221, %s222
      %p234 = scmp.eq.s32.totalorder %s23, 3
      %p235 = por %p233, %p234
      %p237 = scmp.ne.s32.totalorder %s222, %s236
      %p238 = scmp.eq.s32.totalorder %s23, 0
      %p239 = por %p237, %p238
      %s240 = ssub.s32 %s24, %s36
      %p241 = scmp.eq.s32.totalorder %s240, 0
      %s243 = sadd.s32 %s242, 1
      %s244 = scalar_select %p241, %s242, %s243
      %p247 = pneg %p241
      %p248 = scmp.eq.s32.totalorder %s17, 3
      %p249 = por %p247, %p248
      %p250 = scmp.ne.s32.totalorder %s242, %s245
      %p251 = scmp.eq.s32.totalorder %s17, 0
      %p252 = por %p250, %p251
      %p253 = scmp.ne.s32.totalorder %s242, %s245
      %p254 = scmp.eq.s32.totalorder %s22, 3
      %p255 = por %p253, %p254
      %p256 = scmp.ne.s32.totalorder %s245, %s246
      %p257 = scmp.eq.s32.totalorder %s22, 0
      %p258 = por %p256, %p257
      %p259 = scmp.ne.s32.totalorder %s245, %s246
      %p260 = scmp.eq.s32.totalorder %s23, 3
      %p261 = por %p259, %p260
      %p263 = scmp.ne.s32.totalorder %s246, %s262
      %p264 = scmp.eq.s32.totalorder %s23, 0
      %p265 = por %p263, %p264
      %p266 = scmp.le.s32.totalorder 1, %s17
      %p267 = scmp.lt.s32.totalorder %s17, 5
      %p268 = pnand %p266, %p267
      %p269 = pneg %p268
      // Predicated region
      $region9: #{tpu_custom_call.1} parent=5 // pred_check
        _
      $region10: #{tpu_custom_call.1} parent=5 // pred_check_branch
        %271 = sbr.rel (%p268) target = $region12
      $region11: #{tpu_custom_call.1} parent=5 // pred_region
        %s272 = ssub.s32 %s17, 1
        // Predicated region
        $region13: #{tpu_custom_call.1} parent=11 // pred_check
          %p273 = pneg %p232
        $region14: #{tpu_custom_call.1} parent=11 // pred_check_branch
          %275 = sbr.rel (%p273) target = $region16
        $region15: #{tpu_custom_call.1} parent=11 // pred_region
          _
        $region16: #{tpu_custom_call.1} parent=11 // pred_fallthru
          _
      $region12: #{tpu_custom_call.1} parent=5 // pred_fallthru
        _
      %p276 = scmp.lt.s32.totalorder %s17, 4
      // Predicated region
      $region17: #{tpu_custom_call.1} parent=5 // pred_check
        %p277 = pneg %p276
      $region18: #{tpu_custom_call.1} parent=5 // pred_check_branch
        %279 = sbr.rel (%p277) target = $region20
      $region19: #{tpu_custom_call.1} parent=5 // pred_region
        // Predicated region
        $region21: #{tpu_custom_call.1} parent=19 // pred_check
          %p280 = pneg %p49
        $region22: #{tpu_custom_call.1} parent=19 // pred_check_branch
          %282 = sbr.rel (%p280) target = $region24
        $region23: #{tpu_custom_call.1} parent=19 // pred_region
          %p283 = scmp.lt.s32.totalorder %s24, 1
          %s284 = scalar_select %p283, %s24, 1
          %s285 = smul.addr %s284, 2
          %s286 = smul.addr %s285, 8
          %s287 = scalar_lea.vmem %s0, %s286
        $region24: #{tpu_custom_call.1} parent=19 // pred_fallthru
          _
        // Predicated region
        $region25: #{tpu_custom_call.1} parent=19 // pred_check
          %p288 = pneg %p75
        $region26: #{tpu_custom_call.1} parent=19 // pred_check_branch
          %290 = sbr.rel (%p288) target = $region28
        $region27: #{tpu_custom_call.1} parent=19 // pred_region
          %p291 = scmp.lt.s32.totalorder %s25, 1
          %s292 = scalar_select %p291, %s25, 1
          %s293 = smul.addr %s292, 16
          %s294 = smul.addr %s293, 4
          %s295 = scalar_lea.vmem %s1, %s294
        $region28: #{tpu_custom_call.1} parent=19 // pred_fallthru
          _
        // Predicated region
        $region29: #{tpu_custom_call.1} parent=19 // pred_check
          %p296 = pneg %p101
        $region30: #{tpu_custom_call.1} parent=19 // pred_check_branch
          %298 = sbr.rel (%p296) target = $region32
        $region31: #{tpu_custom_call.1} parent=19 // pred_region
          %p299 = scmp.lt.s32.totalorder %s25, 1
          %s300 = scalar_select %p299, %s25, 1
          %s301 = smul.addr %s300, 8
          %s302 = smul.addr %s301, 4
          %s303 = scalar_lea.vmem %s2, %s302
        $region32: #{tpu_custom_call.1} parent=19 // pred_fallthru
          _
        // Predicated region
        $region33: #{tpu_custom_call.1} parent=19 // pred_check
          %p304 = pneg %p127
        $region34: #{tpu_custom_call.1} parent=19 // pred_check_branch
          %306 = sbr.rel (%p304) target = $region36
        $region35: #{tpu_custom_call.1} parent=19 // pred_region
          %p307 = scmp.lt.s32.totalorder %s25, 1
          %s308 = scalar_select %p307, %s25, 1
          %s309 = smul.addr %s308, 16
          %s310 = smul.addr %s309, 4
          %s311 = scalar_lea.vmem %s3, %s310
        $region36: #{tpu_custom_call.1} parent=19 // pred_fallthru
          _
        // Predicated region
        $region37: #{tpu_custom_call.1} parent=19 // pred_check
          %p312 = pneg %p153
        $region38: #{tpu_custom_call.1} parent=19 // pred_check_branch
          %314 = sbr.rel (%p312) target = $region40
        $region39: #{tpu_custom_call.1} parent=19 // pred_region
          %p315 = scmp.lt.s32.totalorder %s25, 1
          %s316 = scalar_select %p315, %s25, 1
          %s317 = smul.addr %s316, 32
          %s318 = smul.addr %s317, 4
          %s319 = scalar_lea.vmem %s4, %s318
        $region40: #{tpu_custom_call.1} parent=19 // pred_fallthru
          _
        // Predicated region
        $region41: #{tpu_custom_call.1} parent=19 // pred_check
          %p320 = pneg %p179
        $region42: #{tpu_custom_call.1} parent=19 // pred_check_branch
          %322 = sbr.rel (%p320) target = $region44
        $region43: #{tpu_custom_call.1} parent=19 // pred_region
          %p323 = scmp.lt.s32.totalorder %s25, 1
          %s324 = scalar_select %p323, %s25, 1
          %s325 = smul.addr %s324, 8
          %s326 = scalar_lea.vmem %s5, %s325
        $region44: #{tpu_custom_call.1} parent=19 // pred_fallthru
          _
        // Predicated region
        $region45: #{tpu_custom_call.1} parent=19 // pred_check
          %p327 = pneg %p205
        $region46: #{tpu_custom_call.1} parent=19 // pred_check_branch
          %329 = sbr.rel (%p327) target = $region48
        $region47: #{tpu_custom_call.1} parent=19 // pred_region
          %p330 = scmp.lt.s32.totalorder %s25, 1
          %s331 = scalar_select %p330, %s25, 1
          %s332 = smul.addr %s331, 2
          %s333 = scalar_lea.vmem %s6, %s332
        $region48: #{tpu_custom_call.1} parent=19 // pred_fallthru
          _
      $region20: #{tpu_custom_call.1} parent=5 // pred_fallthru
        _
      %p334 = scmp.le.s32.totalorder 1, %s17
      %p335 = scmp.lt.s32.totalorder %s17, 5
      %p336 = pnand %p334, %p335
      %p337 = pneg %p336
      // Predicated region
      $region49: #{tpu_custom_call.1} parent=5 // pred_check
        _
      $region50: #{tpu_custom_call.1} parent=5 // pred_check_branch
        %339 = sbr.rel (%p336) target = $region52
      $region51: #{tpu_custom_call.1} parent=5 // pred_region
        %s340 = ssub.s32 %s17, 1
        %p341 = scmp.lt.s32.totalorder %s26, 1
        %s342 = scalar_select %p341, %s26, 1
        %s343 = smul.addr %s342, 2
        %s344 = smul.addr %s343, 8
        %s345 = scalar_lea.vmem %s0, %s344
        %p346 = pneg %p55
        %p347 = pneg %p52
        %p348 = scmp.lt.s32.totalorder %s27, 1
        %s349 = scalar_select %p348, %s27, 1
        %s350 = smul.addr %s349, 16
        %s351 = smul.addr %s350, 4
        %s352 = scalar_lea.vmem %s1, %s351
        %p353 = pneg %p81
        %p354 = pneg %p78
        %p355 = scmp.lt.s32.totalorder %s27, 1
        %s356 = scalar_select %p355, %s27, 1
        %s357 = smul.addr %s356, 8
        %s358 = smul.addr %s357, 4
        %s359 = scalar_lea.vmem %s2, %s358
        %p360 = pneg %p107
        %p361 = pneg %p104
        %p362 = scmp.lt.s32.totalorder %s27, 1
        %s363 = scalar_select %p362, %s27, 1
        %s364 = smul.addr %s363, 16
        %s365 = smul.addr %s364, 4
        %s366 = scalar_lea.vmem %s3, %s365
        %p367 = pneg %p133
        %p368 = pneg %p130
        %p369 = scmp.lt.s32.totalorder %s27, 1
        %s370 = scalar_select %p369, %s27, 1
        %s371 = smul.addr %s370, 32
        %s372 = smul.addr %s371, 4
        %s373 = scalar_lea.vmem %s4, %s372
        %p374 = pneg %p159
        %p375 = pneg %p156
        %p376 = scmp.lt.s32.totalorder %s27, 1
        %s377 = scalar_select %p376, %s27, 1
        %s378 = smul.addr %s377, 8
        %s379 = scalar_lea.vmem %s5, %s378
        %p380 = pneg %p185
        %p381 = pneg %p182
        %p382 = scmp.lt.s32.totalorder %s27, 1
        %s383 = scalar_select %p382, %s27, 1
        %s384 = smul.addr %s383, 2
        %s385 = scalar_lea.vmem %s6, %s384
        %p386 = pneg %p211
        %p387 = pneg %p208
        %p388 = pneg %p232
        %p389 = pneg %p229
        %p390 = pneg %p258
        %p391 = pneg %p255
        %s392 = sand.u32 %s245, 1
        %s393 = scalar_lea.sflag [#allocation5], %s392
        %s394 = sand.u32 %s245, 1
        %s395 = smul.addr %s394, 8
        %s396 = scalar_lea.vmem [#allocation4], %s395
        %p397 = scmp.lt.s32.totalorder %s26, 1
        %s398 = scalar_select %p397, %s26, 1
        %s399 = smul.addr %s398, 2
        %s400 = smul.addr %s399, 8
        %s401 = scalar_lea.vmem %s0, %s400
        %p402 = scmp.lt.s32.totalorder %s27, 1
        %s403 = scalar_select %p402, %s27, 1
        %s404 = smul.addr %s403, 16
        %s405 = smul.addr %s404, 4
        %s406 = scalar_lea.vmem %s1, %s405
        %p407 = scmp.lt.s32.totalorder %s27, 1
        %s408 = scalar_select %p407, %s27, 1
        %s409 = smul.addr %s408, 8
        %s410 = smul.addr %s409, 4
        %s411 = scalar_lea.vmem %s2, %s410
        %p412 = scmp.lt.s32.totalorder %s27, 1
        %s413 = scalar_select %p412, %s27, 1
        %s414 = smul.addr %s413, 16
        %s415 = smul.addr %s414, 4
        %s416 = scalar_lea.vmem %s3, %s415
        %p417 = scmp.lt.s32.totalorder %s27, 1
        %s418 = scalar_select %p417, %s27, 1
        %s419 = smul.addr %s418, 32
        %s420 = smul.addr %s419, 4
        %s421 = scalar_lea.vmem %s4, %s420
        %p422 = scmp.lt.s32.totalorder %s27, 1
        %s423 = scalar_select %p422, %s27, 1
        %s424 = smul.addr %s423, 8
        %s425 = scalar_lea.vmem %s5, %s424
        %p426 = scmp.lt.s32.totalorder %s27, 1
        %s427 = scalar_select %p426, %s27, 1
        %s428 = smul.addr %s427, 2
        %s429 = scalar_lea.vmem %s6, %s428
        %p431 = scmp.eq.s32.totalorder %s27, 0
        // Predicated region
        $region53: #{tpu_custom_call.1} parent=51 // pred_check
          %p432 = pneg %p431
        $region54: #{tpu_custom_call.1} parent=51 // pred_check_branch
          %434 = sbr.rel (%p432) target = $region56
        $region55: #{tpu_custom_call.1} parent=51 // pred_region
          %v435 = vld [vmem:[%s401] sm:$0xff]
          %v436 = vld [vmem:[%s401 + $0x8] sm:$0xff]
          %vm437 = vcmask 523264
          %438 = vst.msk [vmem:[#allocation2] sm:$0xff] %vm437, %v435
          %439 = vst.msk [vmem:[#allocation2 + $0x8] sm:$0xff] %vm437, %v436
        $region56: #{tpu_custom_call.1} parent=51 // pred_fallthru
          _
        %v440 = vld [vmem:[#allocation2] sm:$0xff]
        %v441 = vld [vmem:[#allocation2 + $0x8] sm:$0xff]
        %v442 = vld [vmem:[%s425] sm:$0x3f]
        %vm443 = vcmask 523264
        %v444 = vsel %vm443, %v440, 0.0
        %445 = vadd.xlane.f32.xlu0 %v444
        %v446 = vpop.xlane.xlu0 %445
        %v447 = vsel %vm443, %v441, 0.0
        %448 = vadd.xlane.f32.xlu0 %v447
        %v449 = vpop.xlane.xlu0 %448
        %v450 = vrcp.pop 64.0
        %v451 = vmul.f32 %v446, %v450
        %v452 = vmul.f32 %v449, %v450
        %v453 = vsub.f32 %v440, %v451
        %v454 = vsub.f32 %v441, %v452
        %v455 = vmul.f32 %v453, %v453
        %v456 = vmul.f32 %v454, %v454
        %v457 = vsel %vm443, %v455, 0.0
        %458 = vadd.xlane.f32.xlu0 %v457
        %v459 = vpop.xlane.xlu0 %458
        %v460 = vsel %vm443, %v456, 0.0
        %461 = vadd.xlane.f32.xlu0 %v460
        %v462 = vpop.xlane.xlu0 %461
        %v463 = vmul.f32 %v459, %v450
        %v464 = vmul.f32 %v462, %v450
        %v465 = vadd.f32 %v463, 1e-05
        %v466 = vadd.f32 %v464, 1e-05
        %v467 = vrsqrt.pop %v465
        %v468 = vrsqrt.pop %v466
        %v469 = vmul.f32 %v453, %v467
        %v470 = vmul.f32 %v454, %v468
        %v471 = vlaneseq
        %v472 = vshrl.u32 %v471, 7
        %v473 = vsub.s32 0, %v472
        %v474 = vrot.slane %v442, %v473
        %v475 = vmul.f32 %v469, %v474
        %v476 = vmul.f32 %v470, %v474
        %v477 = vlaneseq
        %v478 = vshrl.u32 %v477, 7
        %v479 = vsub.s32 1, %v478
        %v480 = vrot.slane %v442, %v479
        %v481 = vadd.f32 %v475, %v480
        %v482 = vadd.f32 %v476, %v480
        %v483 = vpack.c.bf16 %v482, %v481
        %v484 = vld [vmem:[%s406] sm:$0xff]
        %v485 = vld [vmem:[%s406 + $0x8] sm:$0xff]
        %v486 = vld [vmem:[%s406 + $0x10] sm:$0xff]
        %v487 = vld [vmem:[%s406 + $0x18] sm:$0xff]
        %v488 = vld [vmem:[%s406 + $0x20] sm:$0xff]
        %v489 = vld [vmem:[%s406 + $0x28] sm:$0xff]
        %v490 = vld [vmem:[%s406 + $0x30] sm:$0xff]
        %v491 = vld [vmem:[%s406 + $0x38] sm:$0xff]
        %v500 = vunpack.c.l.b16 %v484
        %v501 = vunpack.c.h.b16 %v484
        %v502 = vunpack.c.l.b16 %v485
        %v503 = vunpack.c.h.b16 %v485
        %v504 = vunpack.c.l.b16 %v486
        %v505 = vunpack.c.h.b16 %v486
        %v506 = vunpack.c.l.b16 %v487
        %v507 = vunpack.c.h.b16 %v487
        %v508 = vunpack.c.l.b16 %v488
        %v509 = vunpack.c.h.b16 %v488
        %v510 = vunpack.c.l.b16 %v489
        %v511 = vunpack.c.h.b16 %v489
        %v512 = vunpack.c.l.b16 %v490
        %v513 = vunpack.c.h.b16 %v490
        %v514 = vunpack.c.l.b16 %v491
        %v515 = vunpack.c.h.b16 %v491
        %v516 = vpack.c.b16 %v502, %v500
        %v517 = vpack.c.b16 %v503, %v501
        %v518 = vpack.c.b16 %v506, %v504
        %v519 = vpack.c.b16 %v507, %v505
        %v520 = vpack.c.b16 %v510, %v508
        %v521 = vpack.c.b16 %v511, %v509
        %v522 = vpack.c.b16 %v514, %v512
        %v523 = vpack.c.b16 %v515, %v513
        %v533 = vsel %vm443, %v483, 0
        %535 = vmatprep.subr.bf16.mxu0 0
        %536 = vmatpush1.bf16.msra.mxu0 0
        %537 = vmatprep.subr.bf16.mxu0 0
        %538 = vmatpush1.bf16.msra.mxu0 0
        %539 = vmatprep.subr.bf16.mxu0 0
        %540 = vmatpush1.bf16.msra.mxu0 0
        %541 = vmatprep.subr.bf16.mxu0 0
        %542 = vmatpush1.bf16.msra.mxu0 0
        %543 = vmatprep.subr.bf16.mxu0 %v523
        %544 = vmatpush1.bf16.msra.mxu0 %v522
        %545 = vmatprep.subr.bf16.mxu0 %v521
        %546 = vmatpush1.bf16.msra.mxu0 %v520
        %547 = vmatprep.subr.bf16.mxu0 %v519
        %548 = vmatpush1.bf16.msra.mxu0 %v518
        %549 = vmatprep.subr.bf16.mxu0 %v517
        %550 = vmatpush1.bf16.msra.mxu0 %v516
        %551 = vmatprep.subr.bf16.mxu0 0
        %552 = vmatpush2.bf16.msra.mxu0 0
        %553 = vmatprep.subr.bf16.mxu0 0
        %554 = vmatpush2.bf16.msra.mxu0 0
        %555 = vmatprep.subr.bf16.mxu0 0
        %556 = vmatpush2.bf16.msra.mxu0 0
        %557 = vmatprep.subr.bf16.mxu0 0
        %558 = vmatpush2.bf16.msra.mxu0 0
        %559 = vmatprep.subr.bf16.mxu0 0
        %560 = vmatpush2.bf16.msra.mxu0 0
        %561 = vmatprep.subr.bf16.mxu0 0
        %562 = vmatpush2.bf16.msra.mxu0 0
        %563 = vmatprep.subr.bf16.mxu0 0
        %564 = vmatpush2.bf16.msra.mxu0 0
        %565 = vmatprep.subr.bf16.mxu0 0
        %566 = vmatpush2.bf16.msra.mxu0 0
        %567 = vmatprep.mubr.bf16.mxu0 0
        %568 = vmatmul.mubr.bf16.gmra.mxu0 %v533
        %v569 = vpop.f32.mrf.mxu0
        %v570 = vadd.f32 0.0, %v569
        %v571 = vpop.f32.mrf.mxu0
        %v572 = vadd.f32 0.0, %v571
        %v573 = vpop.f32.mrf.mxu0
        %v574 = vadd.f32 0.0, %v573
        %v575 = vpop.f32.mrf.mxu0
        %v576 = vadd.f32 0.0, %v575
        %577 = vdwg.mxu0
        %v578 = vpack.c.bf16 %v574, %v570
        %v579 = vpack.c.bf16 %v576, %v572
        %v580 = vlaneseq
        %v581 = vand.u32 %v580, 127
        %vm582 = vcmp.lt.s32.totalorder %v581, 12
        %v583 = vsel %vm582, 0.0, -1e+30
        %585 = vrot.lane.b32.xlu0 %v578, 64
        %v586 = vpop.permute.xlu0 %585
        %vm587 = vcmask 130048
        %v589 = vsel %vm587, %v578, 0
        %v592 = vsel %vm587, %v586, 0
        %594 = vmatprep.subr.bf16.mxu0 0
        %595 = vmatpush1.bf16.xpose.msra.mxu0 0
        %596 = vmatprep.subr.bf16.mxu0 0
        %597 = vmatpush1.bf16.xpose.msra.mxu0 0
        %598 = vmatprep.subr.bf16.mxu0 0
        %599 = vmatpush1.bf16.xpose.msra.mxu0 0
        %600 = vmatprep.subr.bf16.mxu0 0
        %601 = vmatpush1.bf16.xpose.msra.mxu0 0
        %602 = vmatprep.subr.bf16.mxu0 0
        %603 = vmatpush1.bf16.xpose.msra.mxu0 0
        %604 = vmatprep.subr.bf16.mxu0 0
        %605 = vmatpush1.bf16.xpose.msra.mxu0 0
        %606 = vmatprep.subr.bf16.mxu0 0
        %607 = vmatpush1.bf16.xpose.msra.mxu0 0
        %608 = vmatprep.subr.bf16.mxu0 0
        %609 = vmatpush1.bf16.xpose.msra.mxu0 %v592
        %610 = vmatprep.subr.bf16.mxu0 0
        %611 = vmatpush2.bf16.xpose.msra.mxu0 0
        %612 = vmatprep.subr.bf16.mxu0 0
        %613 = vmatpush2.bf16.xpose.msra.mxu0 0
        %614 = vmatprep.subr.bf16.mxu0 0
        %615 = vmatpush2.bf16.xpose.msra.mxu0 0
        %616 = vmatprep.subr.bf16.mxu0 0
        %617 = vmatpush2.bf16.xpose.msra.mxu0 0
        %618 = vmatprep.subr.bf16.mxu0 0
        %619 = vmatpush2.bf16.xpose.msra.mxu0 0
        %620 = vmatprep.subr.bf16.mxu0 0
        %621 = vmatpush2.bf16.xpose.msra.mxu0 0
        %622 = vmatprep.subr.bf16.mxu0 0
        %623 = vmatpush2.bf16.xpose.msra.mxu0 0
        %624 = vmatprep.subr.bf16.mxu0 0
        %625 = vmatpush2.bf16.xpose.msra.mxu0 0
        %626 = vmatprep.mubr.bf16.mxu0 0
        %627 = vmatmul.mubr.bf16.gmra.mxu0 %v589
        %v628 = vpop.f32.mrf.mxu0
        %v629 = vadd.f32 %v583, %v628
        %v630 = vpop.f32.mrf.mxu0
        %v631 = vpop.f32.mrf.mxu0
        %v632 = vadd.f32 %v583, %v631
        %v633 = vpop.f32.mrf.mxu0
        %634 = vdwg.mxu0
        %v635 = vsel %vm587, %v629, -inf
        %636 = vmax.xlane.f32.xlu0 %v635
        %v637 = vpop.xlane.xlu0 %636
        %v638 = vsel %vm587, %v632, -inf
        %639 = vmax.xlane.f32.xlu0 %v638
        %v640 = vpop.xlane.xlu0 %639
        %v641 = vsub.f32 %v629, %v637
        %v642 = vsub.f32 %v632, %v640
        %v643 = vmul.f32 %v641, 1.442695
        %v644 = vpow.pop %v643
        %v645 = vmul.f32 %v642, 1.442695
        %v646 = vpow.pop %v645
        %v647 = vsel %vm587, %v644, 0.0
        %648 = vadd.xlane.f32.xlu0 %v647
        %v649 = vpop.xlane.xlu0 %648
        %v650 = vsel %vm587, %v646, 0.0
        %651 = vadd.xlane.f32.xlu0 %v650
        %v652 = vpop.xlane.xlu0 %651
        %v653 = vrcp.pop %v649
        %v654 = vrcp.pop %v652
        %v655 = vmul.f32 %v644, %v653
        %v656 = vmul.f32 %v646, %v654
        %v657 = vpack.c.bf16 %v656, %v655
        %v659 = vsel %vm587, %v657, 0
        %661 = vmatprep.subr.bf16.mxu0 0
        %662 = vmatpush1.bf16.msra.mxu0 0
        %663 = vmatprep.subr.bf16.mxu0 0
        %664 = vmatpush1.bf16.msra.mxu0 0
        %665 = vmatprep.subr.bf16.mxu0 0
        %666 = vmatpush1.bf16.msra.mxu0 0
        %667 = vmatprep.subr.bf16.mxu0 0
        %668 = vmatpush1.bf16.msra.mxu0 0
        %669 = vmatprep.subr.bf16.mxu0 0
        %670 = vmatpush1.bf16.msra.mxu0 0
        %671 = vmatprep.subr.bf16.mxu0 0
        %672 = vmatpush1.bf16.msra.mxu0 0
        %673 = vmatprep.subr.bf16.mxu0 0
        %674 = vmatpush1.bf16.msra.mxu0 0
        %675 = vmatprep.subr.bf16.mxu0 0
        %676 = vmatpush1.bf16.msra.mxu0 %v579
        %677 = vmatprep.subr.bf16.mxu0 0
        %678 = vmatpush2.bf16.msra.mxu0 0
        %679 = vmatprep.subr.bf16.mxu0 0
        %680 = vmatpush2.bf16.msra.mxu0 0
        %681 = vmatprep.subr.bf16.mxu0 0
        %682 = vmatpush2.bf16.msra.mxu0 0
        %683 = vmatprep.subr.bf16.mxu0 0
        %684 = vmatpush2.bf16.msra.mxu0 0
        %685 = vmatprep.subr.bf16.mxu0 0
        %686 = vmatpush2.bf16.msra.mxu0 0
        %687 = vmatprep.subr.bf16.mxu0 0
        %688 = vmatpush2.bf16.msra.mxu0 0
        %689 = vmatprep.subr.bf16.mxu0 0
        %690 = vmatpush2.bf16.msra.mxu0 0
        %691 = vmatprep.subr.bf16.mxu0 0
        %692 = vmatpush2.bf16.msra.mxu0 0
        %693 = vmatprep.mubr.bf16.mxu0 0
        %694 = vmatmul.mubr.bf16.gmra.mxu0 %v659
        %v695 = vpop.f32.mrf.mxu0
        %v696 = vadd.f32 0.0, %v695
        %v697 = vpop.f32.mrf.mxu0
        %v698 = vpop.f32.mrf.mxu0
        %v699 = vadd.f32 0.0, %v698
        %v700 = vpop.f32.mrf.mxu0
        %701 = vdwg.mxu0
        %v702 = vpack.c.bf16 %v699, %v696
        %v704 = vunpack.c.l.b16 %v702
        %v705 = vunpack.c.h.b16 %v702
        %v706 = vpack.c.b16 %v704, %v704
        %v707 = vpack.c.b16 %v705, %v705
        %vm710 = vcmask 125952
        %711 = vst.msk [vmem:[#allocation3] sm:$0xf] %vm710, %v706
        %712 = vst.msk [vmem:[#allocation3 + $0x4] sm:$0xf] %vm710, %v707
        %713 = vrot.lane.b32.xlu0 %v578, 112
        %v714 = vpop.permute.xlu0 %713
        %715 = vrot.lane.b32.xlu0 %v578, 48
        %v716 = vpop.permute.xlu0 %715
        %v718 = vsel %vm587, %v714, 0
        %v721 = vsel %vm587, %v716, 0
        %723 = vmatprep.subr.bf16.mxu0 0
        %724 = vmatpush1.bf16.xpose.msra.mxu0 0
        %725 = vmatprep.subr.bf16.mxu0 0
        %726 = vmatpush1.bf16.xpose.msra.mxu0 0
        %727 = vmatprep.subr.bf16.mxu0 0
        %728 = vmatpush1.bf16.xpose.msra.mxu0 0
        %729 = vmatprep.subr.bf16.mxu0 0
        %730 = vmatpush1.bf16.xpose.msra.mxu0 0
        %731 = vmatprep.subr.bf16.mxu0 0
        %732 = vmatpush1.bf16.xpose.msra.mxu0 0
        %733 = vmatprep.subr.bf16.mxu0 0
        %734 = vmatpush1.bf16.xpose.msra.mxu0 0
        %735 = vmatprep.subr.bf16.mxu0 0
        %736 = vmatpush1.bf16.xpose.msra.mxu0 0
        %737 = vmatprep.subr.bf16.mxu0 0
        %738 = vmatpush1.bf16.xpose.msra.mxu0 %v721
        %739 = vmatprep.subr.bf16.mxu0 0
        %740 = vmatpush2.bf16.xpose.msra.mxu0 0
        %741 = vmatprep.subr.bf16.mxu0 0
        %742 = vmatpush2.bf16.xpose.msra.mxu0 0
        %743 = vmatprep.subr.bf16.mxu0 0
        %744 = vmatpush2.bf16.xpose.msra.mxu0 0
        %745 = vmatprep.subr.bf16.mxu0 0
        %746 = vmatpush2.bf16.xpose.msra.mxu0 0
        %747 = vmatprep.subr.bf16.mxu0 0
        %748 = vmatpush2.bf16.xpose.msra.mxu0 0
        %749 = vmatprep.subr.bf16.mxu0 0
        %750 = vmatpush2.bf16.xpose.msra.mxu0 0
        %751 = vmatprep.subr.bf16.mxu0 0
        %752 = vmatpush2.bf16.xpose.msra.mxu0 0
        %753 = vmatprep.subr.bf16.mxu0 0
        %754 = vmatpush2.bf16.xpose.msra.mxu0 0
        %755 = vmatprep.mubr.bf16.mxu0 0
        %756 = vmatmul.mubr.bf16.gmra.mxu0 %v718
        %v757 = vpop.f32.mrf.mxu0
        %v758 = vadd.f32 %v583, %v757
        %v759 = vpop.f32.mrf.mxu0
        %v760 = vpop.f32.mrf.mxu0
        %v761 = vadd.f32 %v583, %v760
        %v762 = vpop.f32.mrf.mxu0
        %763 = vdwg.mxu0
        %v764 = vsel %vm587, %v758, -inf
        %765 = vmax.xlane.f32.xlu0 %v764
        %v766 = vpop.xlane.xlu0 %765
        %v767 = vsel %vm587, %v761, -inf
        %768 = vmax.xlane.f32.xlu0 %v767
        %v769 = vpop.xlane.xlu0 %768
        %v770 = vsub.f32 %v758, %v766
        %v771 = vsub.f32 %v761, %v769
        %v772 = vmul.f32 %v770, 1.442695
        %v773 = vpow.pop %v772
        %v774 = vmul.f32 %v771, 1.442695
        %v775 = vpow.pop %v774
        %v776 = vsel %vm587, %v773, 0.0
        %777 = vadd.xlane.f32.xlu0 %v776
        %v778 = vpop.xlane.xlu0 %777
        %v779 = vsel %vm587, %v775, 0.0
        %780 = vadd.xlane.f32.xlu0 %v779
        %v781 = vpop.xlane.xlu0 %780
        %v782 = vrcp.pop %v778
        %v783 = vrcp.pop %v781
        %v784 = vmul.f32 %v773, %v782
        %v785 = vmul.f32 %v775, %v783
        %v786 = vpack.c.bf16 %v785, %v784
        %788 = vrot.lane.b32.xlu0 %v579, 112
        %v789 = vpop.permute.xlu0 %788
        %v792 = vsel %vm587, %v786, 0
        %794 = vmatprep.subr.bf16.mxu0 0
        %795 = vmatpush1.bf16.msra.mxu0 0
        %796 = vmatprep.subr.bf16.mxu0 0
        %797 = vmatpush1.bf16.msra.mxu0 0
        %798 = vmatprep.subr.bf16.mxu0 0
        %799 = vmatpush1.bf16.msra.mxu0 0
        %800 = vmatprep.subr.bf16.mxu0 0
        %801 = vmatpush1.bf16.msra.mxu0 0
        %802 = vmatprep.subr.bf16.mxu0 0
        %803 = vmatpush1.bf16.msra.mxu0 0
        %804 = vmatprep.subr.bf16.mxu0 0
        %805 = vmatpush1.bf16.msra.mxu0 0
        %806 = vmatprep.subr.bf16.mxu0 0
        %807 = vmatpush1.bf16.msra.mxu0 0
        %808 = vmatprep.subr.bf16.mxu0 0
        %809 = vmatpush1.bf16.msra.mxu0 %v789
        %810 = vmatprep.subr.bf16.mxu0 0
        %811 = vmatpush2.bf16.msra.mxu0 0
        %812 = vmatprep.subr.bf16.mxu0 0
        %813 = vmatpush2.bf16.msra.mxu0 0
        %814 = vmatprep.subr.bf16.mxu0 0
        %815 = vmatpush2.bf16.msra.mxu0 0
        %816 = vmatprep.subr.bf16.mxu0 0
        %817 = vmatpush2.bf16.msra.mxu0 0
        %818 = vmatprep.subr.bf16.mxu0 0
        %819 = vmatpush2.bf16.msra.mxu0 0
        %820 = vmatprep.subr.bf16.mxu0 0
        %821 = vmatpush2.bf16.msra.mxu0 0
        %822 = vmatprep.subr.bf16.mxu0 0
        %823 = vmatpush2.bf16.msra.mxu0 0
        %824 = vmatprep.subr.bf16.mxu0 0
        %825 = vmatpush2.bf16.msra.mxu0 0
        %826 = vmatprep.mubr.bf16.mxu0 0
        %827 = vmatmul.mubr.bf16.gmra.mxu0 %v792
        %v828 = vpop.f32.mrf.mxu0
        %v829 = vadd.f32 0.0, %v828
        %v830 = vpop.f32.mrf.mxu0
        %v831 = vpop.f32.mrf.mxu0
        %v832 = vadd.f32 0.0, %v831
        %v833 = vpop.f32.mrf.mxu0
        %834 = vdwg.mxu0
        %v835 = vpack.c.bf16 %v832, %v829
        %v837 = vunpack.c.l.b16 %v835
        %v838 = vunpack.c.h.b16 %v835
        %v839 = vpack.c.b16 %v837, %v837
        %v840 = vpack.c.b16 %v838, %v838
        %841 = vrot.lane.b32.xlu0 %v839, 16
        %v842 = vpop.permute.xlu0 %841
        %843 = vrot.lane.b32.xlu0 %v840, 16
        %v844 = vpop.permute.xlu0 %843
        %vm847 = vcmask 257152
        %848 = vst.msk [vmem:[#allocation3] sm:$0xf] %vm847, %v842
        %849 = vst.msk [vmem:[#allocation3 + $0x4] sm:$0xf] %vm847, %v844
        %850 = vrot.lane.b32.xlu0 %v578, 96
        %v851 = vpop.permute.xlu0 %850
        %852 = vrot.lane.b32.xlu0 %v578, 32
        %v853 = vpop.permute.xlu0 %852
        %v855 = vsel %vm587, %v851, 0
        %v858 = vsel %vm587, %v853, 0
        %860 = vmatprep.subr.bf16.mxu0 0
        %861 = vmatpush1.bf16.xpose.msra.mxu0 0
        %862 = vmatprep.subr.bf16.mxu0 0
        %863 = vmatpush1.bf16.xpose.msra.mxu0 0
        %864 = vmatprep.subr.bf16.mxu0 0
        %865 = vmatpush1.bf16.xpose.msra.mxu0 0
        %866 = vmatprep.subr.bf16.mxu0 0
        %867 = vmatpush1.bf16.xpose.msra.mxu0 0
        %868 = vmatprep.subr.bf16.mxu0 0
        %869 = vmatpush1.bf16.xpose.msra.mxu0 0
        %870 = vmatprep.subr.bf16.mxu0 0
        %871 = vmatpush1.bf16.xpose.msra.mxu0 0
        %872 = vmatprep.subr.bf16.mxu0 0
        %873 = vmatpush1.bf16.xpose.msra.mxu0 0
        %874 = vmatprep.subr.bf16.mxu0 0
        %875 = vmatpush1.bf16.xpose.msra.mxu0 %v858
        %876 = vmatprep.subr.bf16.mxu0 0
        %877 = vmatpush2.bf16.xpose.msra.mxu0 0
        %878 = vmatprep.subr.bf16.mxu0 0
        %879 = vmatpush2.bf16.xpose.msra.mxu0 0
        %880 = vmatprep.subr.bf16.mxu0 0
        %881 = vmatpush2.bf16.xpose.msra.mxu0 0
        %882 = vmatprep.subr.bf16.mxu0 0
        %883 = vmatpush2.bf16.xpose.msra.mxu0 0
        %884 = vmatprep.subr.bf16.mxu0 0
        %885 = vmatpush2.bf16.xpose.msra.mxu0 0
        %886 = vmatprep.subr.bf16.mxu0 0
        %887 = vmatpush2.bf16.xpose.msra.mxu0 0
        %888 = vmatprep.subr.bf16.mxu0 0
        %889 = vmatpush2.bf16.xpose.msra.mxu0 0
        %890 = vmatprep.subr.bf16.mxu0 0
        %891 = vmatpush2.bf16.xpose.msra.mxu0 0
        %892 = vmatprep.mubr.bf16.mxu0 0
        %893 = vmatmul.mubr.bf16.gmra.mxu0 %v855
        %v894 = vpop.f32.mrf.mxu0
        %v895 = vadd.f32 %v583, %v894
        %v896 = vpop.f32.mrf.mxu0
        %v897 = vpop.f32.mrf.mxu0
        %v898 = vadd.f32 %v583, %v897
        %v899 = vpop.f32.mrf.mxu0
        %900 = vdwg.mxu0
        %v901 = vsel %vm587, %v895, -inf
        %902 = vmax.xlane.f32.xlu0 %v901
        %v903 = vpop.xlane.xlu0 %902
        %v904 = vsel %vm587, %v898, -inf
        %905 = vmax.xlane.f32.xlu0 %v904
        %v906 = vpop.xlane.xlu0 %905
        %v907 = vsub.f32 %v895, %v903
        %v908 = vsub.f32 %v898, %v906
        %v909 = vmul.f32 %v907, 1.442695
        %v910 = vpow.pop %v909
        %v911 = vmul.f32 %v908, 1.442695
        %v912 = vpow.pop %v911
        %v913 = vsel %vm587, %v910, 0.0
        %914 = vadd.xlane.f32.xlu0 %v913
        %v915 = vpop.xlane.xlu0 %914
        %v916 = vsel %vm587, %v912, 0.0
        %917 = vadd.xlane.f32.xlu0 %v916
        %v918 = vpop.xlane.xlu0 %917
        %v919 = vrcp.pop %v915
        %v920 = vrcp.pop %v918
        %v921 = vmul.f32 %v910, %v919
        %v922 = vmul.f32 %v912, %v920
        %v923 = vpack.c.bf16 %v922, %v921
        %924 = vrot.lane.b32.xlu0 %v579, 96
        %v925 = vpop.permute.xlu0 %924
        %v928 = vsel %vm587, %v923, 0
        %930 = vmatprep.subr.bf16.mxu0 0
        %931 = vmatpush1.bf16.msra.mxu0 0
        %932 = vmatprep.subr.bf16.mxu0 0
        %933 = vmatpush1.bf16.msra.mxu0 0
        %934 = vmatprep.subr.bf16.mxu0 0
        %935 = vmatpush1.bf16.msra.mxu0 0
        %936 = vmatprep.subr.bf16.mxu0 0
        %937 = vmatpush1.bf16.msra.mxu0 0
        %938 = vmatprep.subr.bf16.mxu0 0
        %939 = vmatpush1.bf16.msra.mxu0 0
        %940 = vmatprep.subr.bf16.mxu0 0
        %941 = vmatpush1.bf16.msra.mxu0 0
        %942 = vmatprep.subr.bf16.mxu0 0
        %943 = vmatpush1.bf16.msra.mxu0 0
        %944 = vmatprep.subr.bf16.mxu0 0
        %945 = vmatpush1.bf16.msra.mxu0 %v925
        %946 = vmatprep.subr.bf16.mxu0 0
        %947 = vmatpush2.bf16.msra.mxu0 0
        %948 = vmatprep.subr.bf16.mxu0 0
        %949 = vmatpush2.bf16.msra.mxu0 0
        %950 = vmatprep.subr.bf16.mxu0 0
        %951 = vmatpush2.bf16.msra.mxu0 0
        %952 = vmatprep.subr.bf16.mxu0 0
        %953 = vmatpush2.bf16.msra.mxu0 0
        %954 = vmatprep.subr.bf16.mxu0 0
        %955 = vmatpush2.bf16.msra.mxu0 0
        %956 = vmatprep.subr.bf16.mxu0 0
        %957 = vmatpush2.bf16.msra.mxu0 0
        %958 = vmatprep.subr.bf16.mxu0 0
        %959 = vmatpush2.bf16.msra.mxu0 0
        %960 = vmatprep.subr.bf16.mxu0 0
        %961 = vmatpush2.bf16.msra.mxu0 0
        %962 = vmatprep.mubr.bf16.mxu0 0
        %963 = vmatmul.mubr.bf16.gmra.mxu0 %v928
        %v964 = vpop.f32.mrf.mxu0
        %v965 = vadd.f32 0.0, %v964
        %v966 = vpop.f32.mrf.mxu0
        %v967 = vpop.f32.mrf.mxu0
        %v968 = vadd.f32 0.0, %v967
        %v969 = vpop.f32.mrf.mxu0
        %970 = vdwg.mxu0
        %v971 = vpack.c.bf16 %v968, %v965
        %v973 = vunpack.c.l.b16 %v971
        %v974 = vunpack.c.h.b16 %v971
        %v975 = vpack.c.b16 %v973, %v973
        %v976 = vpack.c.b16 %v974, %v974
        %977 = vrot.lane.b32.xlu0 %v975, 32
        %v978 = vpop.permute.xlu0 %977
        %979 = vrot.lane.b32.xlu0 %v976, 32
        %v980 = vpop.permute.xlu0 %979
        %vm983 = vcmask 388352
        %984 = vst.msk [vmem:[#allocation3] sm:$0xf] %vm983, %v978
        %985 = vst.msk [vmem:[#allocation3 + $0x4] sm:$0xf] %vm983, %v980
        %986 = vrot.lane.b32.xlu0 %v578, 80
        %v987 = vpop.permute.xlu0 %986
        %988 = vrot.lane.b32.xlu0 %v578, 16
        %v989 = vpop.permute.xlu0 %988
        %v991 = vsel %vm587, %v987, 0
        %v994 = vsel %vm587, %v989, 0
        %996 = vmatprep.subr.bf16.mxu0 0
        %997 = vmatpush1.bf16.xpose.msra.mxu0 0
        %998 = vmatprep.subr.bf16.mxu0 0
        %999 = vmatpush1.bf16.xpose.msra.mxu0 0
        %1000 = vmatprep.subr.bf16.mxu0 0
        %1001 = vmatpush1.bf16.xpose.msra.mxu0 0
        %1002 = vmatprep.subr.bf16.mxu0 0
        %1003 = vmatpush1.bf16.xpose.msra.mxu0 0
        %1004 = vmatprep.subr.bf16.mxu0 0
        %1005 = vmatpush1.bf16.xpose.msra.mxu0 0
        %1006 = vmatprep.subr.bf16.mxu0 0
        %1007 = vmatpush1.bf16.xpose.msra.mxu0 0
        %1008 = vmatprep.subr.bf16.mxu0 0
        %1009 = vmatpush1.bf16.xpose.msra.mxu0 0
        %1010 = vmatprep.subr.bf16.mxu0 0
        %1011 = vmatpush1.bf16.xpose.msra.mxu0 %v994
        %1012 = vmatprep.subr.bf16.mxu0 0
        %1013 = vmatpush2.bf16.xpose.msra.mxu0 0
        %1014 = vmatprep.subr.bf16.mxu0 0
        %1015 = vmatpush2.bf16.xpose.msra.mxu0 0
        %1016 = vmatprep.subr.bf16.mxu0 0
        %1017 = vmatpush2.bf16.xpose.msra.mxu0 0
        %1018 = vmatprep.subr.bf16.mxu0 0
        %1019 = vmatpush2.bf16.xpose.msra.mxu0 0
        %1020 = vmatprep.subr.bf16.mxu0 0
        %1021 = vmatpush2.bf16.xpose.msra.mxu0 0
        %1022 = vmatprep.subr.bf16.mxu0 0
        %1023 = vmatpush2.bf16.xpose.msra.mxu0 0
        %1024 = vmatprep.subr.bf16.mxu0 0
        %1025 = vmatpush2.bf16.xpose.msra.mxu0 0
        %1026 = vmatprep.subr.bf16.mxu0 0
        %1027 = vmatpush2.bf16.xpose.msra.mxu0 0
        %1028 = vmatprep.mubr.bf16.mxu0 0
        %1029 = vmatmul.mubr.bf16.gmra.mxu0 %v991
        %v1030 = vpop.f32.mrf.mxu0
        %v1031 = vadd.f32 %v583, %v1030
        %v1032 = vpop.f32.mrf.mxu0
        %v1033 = vpop.f32.mrf.mxu0
        %v1034 = vadd.f32 %v583, %v1033
        %v1035 = vpop.f32.mrf.mxu0
        %1036 = vdwg.mxu0
        %v1037 = vsel %vm587, %v1031, -inf
        %1038 = vmax.xlane.f32.xlu0 %v1037
        %v1039 = vpop.xlane.xlu0 %1038
        %v1040 = vsel %vm587, %v1034, -inf
        %1041 = vmax.xlane.f32.xlu0 %v1040
        %v1042 = vpop.xlane.xlu0 %1041
        %v1043 = vsub.f32 %v1031, %v1039
        %v1044 = vsub.f32 %v1034, %v1042
        %v1045 = vmul.f32 %v1043, 1.442695
        %v1046 = vpow.pop %v1045
        %v1047 = vmul.f32 %v1044, 1.442695
        %v1048 = vpow.pop %v1047
        %v1049 = vsel %vm587, %v1046, 0.0
        %1050 = vadd.xlane.f32.xlu0 %v1049
        %v1051 = vpop.xlane.xlu0 %1050
        %v1052 = vsel %vm587, %v1048, 0.0
        %1053 = vadd.xlane.f32.xlu0 %v1052
        %v1054 = vpop.xlane.xlu0 %1053
        %v1055 = vrcp.pop %v1051
        %v1056 = vrcp.pop %v1054
        %v1057 = vmul.f32 %v1046, %v1055
        %v1058 = vmul.f32 %v1048, %v1056
        %v1059 = vpack.c.bf16 %v1058, %v1057
        %1060 = vrot.lane.b32.xlu0 %v579, 80
        %v1061 = vpop.permute.xlu0 %1060
        %v1064 = vsel %vm587, %v1059, 0
        %1066 = vmatprep.subr.bf16.mxu0 0
        %1067 = vmatpush1.bf16.msra.mxu0 0
        %1068 = vmatprep.subr.bf16.mxu0 0
        %1069 = vmatpush1.bf16.msra.mxu0 0
        %1070 = vmatprep.subr.bf16.mxu0 0
        %1071 = vmatpush1.bf16.msra.mxu0 0
        %1072 = vmatprep.subr.bf16.mxu0 0
        %1073 = vmatpush1.bf16.msra.mxu0 0
        %1074 = vmatprep.subr.bf16.mxu0 0
        %1075 = vmatpush1.bf16.msra.mxu0 0
        %1076 = vmatprep.subr.bf16.mxu0 0
        %1077 = vmatpush1.bf16.msra.mxu0 0
        %1078 = vmatprep.subr.bf16.mxu0 0
        %1079 = vmatpush1.bf16.msra.mxu0 0
        %1080 = vmatprep.subr.bf16.mxu0 0
        %1081 = vmatpush1.bf16.msra.mxu0 %v1061
        %1082 = vmatprep.subr.bf16.mxu0 0
        %1083 = vmatpush2.bf16.msra.mxu0 0
        %1084 = vmatprep.subr.bf16.mxu0 0
        %1085 = vmatpush2.bf16.msra.mxu0 0
        %1086 = vmatprep.subr.bf16.mxu0 0
        %1087 = vmatpush2.bf16.msra.mxu0 0
        %1088 = vmatprep.subr.bf16.mxu0 0
        %1089 = vmatpush2.bf16.msra.mxu0 0
        %1090 = vmatprep.subr.bf16.mxu0 0
        %1091 = vmatpush2.bf16.msra.mxu0 0
        %1092 = vmatprep.subr.bf16.mxu0 0
        %1093 = vmatpush2.bf16.msra.mxu0 0
        %1094 = vmatprep.subr.bf16.mxu0 0
        %1095 = vmatpush2.bf16.msra.mxu0 0
        %1096 = vmatprep.subr.bf16.mxu0 0
        %1097 = vmatpush2.bf16.msra.mxu0 0
        %1098 = vmatprep.mubr.bf16.mxu0 0
        %1099 = vmatmul.mubr.bf16.gmra.mxu0 %v1064
        %v1100 = vpop.f32.mrf.mxu0
        %v1101 = vadd.f32 0.0, %v1100
        %v1102 = vpop.f32.mrf.mxu0
        %v1103 = vpop.f32.mrf.mxu0
        %v1104 = vadd.f32 0.0, %v1103
        %v1105 = vpop.f32.mrf.mxu0
        %1106 = vdwg.mxu0
        %v1107 = vpack.c.bf16 %v1104, %v1101
        %v1109 = vunpack.c.l.b16 %v1107
        %v1110 = vunpack.c.h.b16 %v1107
        %v1111 = vpack.c.b16 %v1109, %v1109
        %v1112 = vpack.c.b16 %v1110, %v1110
        %1113 = vrot.lane.b32.xlu0 %v1111, 48
        %v1114 = vpop.permute.xlu0 %1113
        %1115 = vrot.lane.b32.xlu0 %v1112, 48
        %v1116 = vpop.permute.xlu0 %1115
        %vm1119 = vcmask 519552
        %1120 = vst.msk [vmem:[#allocation3] sm:$0xf] %vm1119, %v1114
        %1121 = vst.msk [vmem:[#allocation3 + $0x4] sm:$0xf] %vm1119, %v1116
        %v1122 = vld [vmem:[#allocation3] sm:$0xf]
        %v1123 = vld [vmem:[#allocation3 + $0x4] sm:$0xf]
        %v1124 = vld [vmem:[%s411] sm:$0xf]
        %v1125 = vld [vmem:[%s411 + $0x4] sm:$0xf]
        %v1126 = vld [vmem:[%s411 + $0x8] sm:$0xf]
        %v1127 = vld [vmem:[%s411 + $0xc] sm:$0xf]
        %v1128 = vld [vmem:[%s411 + $0x10] sm:$0xf]
        %v1129 = vld [vmem:[%s411 + $0x14] sm:$0xf]
        %v1130 = vld [vmem:[%s411 + $0x18] sm:$0xf]
        %v1131 = vld [vmem:[%s411 + $0x1c] sm:$0xf]
        %v1134 = vunpack.c.l.b16 %v1122
        %v1135 = vunpack.c.l.b16 %v1123
        %v1136 = vpack.c.b16 %v1135, %v1134
        %v1145 = vunpack.c.l.b16 %v1124
        %v1146 = vunpack.c.l.b16 %v1125
        %v1147 = vunpack.c.l.b16 %v1126
        %v1148 = vunpack.c.l.b16 %v1127
        %v1149 = vunpack.c.l.b16 %v1128
        %v1150 = vunpack.c.l.b16 %v1129
        %v1151 = vunpack.c.l.b16 %v1130
        %v1152 = vunpack.c.l.b16 %v1131
        %v1153 = vpack.c.b16 %v1146, %v1145
        %v1154 = vpack.c.b16 %v1148, %v1147
        %v1155 = vpack.c.b16 %v1150, %v1149
        %v1156 = vpack.c.b16 %v1152, %v1151
        %v1162 = vsel %vm443, %v1136, 0
        %1164 = vmatprep.subr.bf16.mxu0 0
        %1165 = vmatpush1.bf16.msra.mxu0 0
        %1166 = vmatprep.subr.bf16.mxu0 0
        %1167 = vmatpush1.bf16.msra.mxu0 0
        %1168 = vmatprep.subr.bf16.mxu0 0
        %1169 = vmatpush1.bf16.msra.mxu0 0
        %1170 = vmatprep.subr.bf16.mxu0 0
        %1171 = vmatpush1.bf16.msra.mxu0 0
        %1172 = vmatprep.subr.bf16.mxu0 0
        %1173 = vmatpush1.bf16.msra.mxu0 %v1156
        %1174 = vmatprep.subr.bf16.mxu0 0
        %1175 = vmatpush1.bf16.msra.mxu0 %v1155
        %1176 = vmatprep.subr.bf16.mxu0 0
        %1177 = vmatpush1.bf16.msra.mxu0 %v1154
        %1178 = vmatprep.subr.bf16.mxu0 0
        %1179 = vmatpush1.bf16.msra.mxu0 %v1153
        %1180 = vmatprep.subr.bf16.mxu0 0
        %1181 = vmatpush2.bf16.msra.mxu0 0
        %1182 = vmatprep.subr.bf16.mxu0 0
        %1183 = vmatpush2.bf16.msra.mxu0 0
        %1184 = vmatprep.subr.bf16.mxu0 0
        %1185 = vmatpush2.bf16.msra.mxu0 0
        %1186 = vmatprep.subr.bf16.mxu0 0
        %1187 = vmatpush2.bf16.msra.mxu0 0
        %1188 = vmatprep.subr.bf16.mxu0 0
        %1189 = vmatpush2.bf16.msra.mxu0 0
        %1190 = vmatprep.subr.bf16.mxu0 0
        %1191 = vmatpush2.bf16.msra.mxu0 0
        %1192 = vmatprep.subr.bf16.mxu0 0
        %1193 = vmatpush2.bf16.msra.mxu0 0
        %1194 = vmatprep.subr.bf16.mxu0 0
        %1195 = vmatpush2.bf16.msra.mxu0 0
        %1196 = vmatprep.mubr.bf16.mxu0 0
        %1197 = vmatmul.mubr.bf16.gmra.mxu0 %v1162
        %v1198 = vpop.f32.mrf.mxu0
        %v1199 = vadd.f32 0.0, %v1198
        %v1200 = vpop.f32.mrf.mxu0
        %v1201 = vpop.f32.mrf.mxu0
        %v1202 = vadd.f32 0.0, %v1201
        %v1203 = vpop.f32.mrf.mxu0
        %1204 = vdwg.mxu0
        %v1205 = vadd.f32 %v440, %v1199
        %v1206 = vadd.f32 %v441, %v1202
        %v1207 = vlaneseq
        %v1208 = vshrl.u32 %v1207, 7
        %v1209 = vsub.s32 2, %v1208
        %v1210 = vrot.slane %v442, %v1209
        %v1211 = vadd.f32 %v1205, %v1210
        %v1212 = vadd.f32 %v1206, %v1210
        %v1213 = vsel %vm443, %v1211, 0.0
        %1214 = vadd.xlane.f32.xlu0 %v1213
        %v1215 = vpop.xlane.xlu0 %1214
        %v1216 = vsel %vm443, %v1212, 0.0
        %1217 = vadd.xlane.f32.xlu0 %v1216
        %v1218 = vpop.xlane.xlu0 %1217
        %v1219 = vmul.f32 %v1215, %v450
        %v1220 = vmul.f32 %v1218, %v450
        %v1221 = vsub.f32 %v1211, %v1219
        %v1222 = vsub.f32 %v1212, %v1220
        %v1223 = vmul.f32 %v1221, %v1221
        %v1224 = vmul.f32 %v1222, %v1222
        %v1225 = vsel %vm443, %v1223, 0.0
        %1226 = vadd.xlane.f32.xlu0 %v1225
        %v1227 = vpop.xlane.xlu0 %1226
        %v1228 = vsel %vm443, %v1224, 0.0
        %1229 = vadd.xlane.f32.xlu0 %v1228
        %v1230 = vpop.xlane.xlu0 %1229
        %v1231 = vmul.f32 %v1227, %v450
        %v1232 = vmul.f32 %v1230, %v450
        %v1233 = vadd.f32 %v1231, 1e-05
        %v1234 = vadd.f32 %v1232, 1e-05
        %v1235 = vrsqrt.pop %v1233
        %v1236 = vrsqrt.pop %v1234
        %v1237 = vmul.f32 %v1221, %v1235
        %v1238 = vmul.f32 %v1222, %v1236
        %v1239 = vlaneseq
        %v1240 = vshrl.u32 %v1239, 7
        %v1241 = vsub.s32 3, %v1240
        %v1242 = vrot.slane %v442, %v1241
        %v1243 = vmul.f32 %v1237, %v1242
        %v1244 = vmul.f32 %v1238, %v1242
        %v1245 = vlaneseq
        %v1246 = vshrl.u32 %v1245, 7
        %v1247 = vsub.s32 4, %v1246
        %v1248 = vrot.slane %v442, %v1247
        %v1249 = vadd.f32 %v1243, %v1248
        %v1250 = vadd.f32 %v1244, %v1248
        %v1251 = vpack.c.bf16 %v1250, %v1249
        %v1252 = vld [vmem:[%s416] sm:$0xff]
        %v1253 = vld [vmem:[%s416 + $0x8] sm:$0xff]
        %v1254 = vld [vmem:[%s416 + $0x10] sm:$0xff]
        %v1255 = vld [vmem:[%s416 + $0x18] sm:$0xff]
        %v1256 = vld [vmem:[%s416 + $0x20] sm:$0xff]
        %v1257 = vld [vmem:[%s416 + $0x28] sm:$0xff]
        %v1258 = vld [vmem:[%s416 + $0x30] sm:$0xff]
        %v1259 = vld [vmem:[%s416 + $0x38] sm:$0xff]
        %v1260 = vld [vmem:[%s429] sm:$0x3]
        %v1262 = vlaneseq
        %v1263 = vshrl.u32 %v1262, 7
        %v1264 = vsub.s32 0, %v1263
        %v1265 = vrot.slane %v1260, %v1264
        %v1266 = vlaneseq
        %v1267 = vshrl.u32 %v1266, 7
        %v1268 = vsub.s32 1, %v1267
        %v1269 = vrot.slane %v1260, %v1268
        %v1280 = vunpack.c.l.b16 %v1252
        %v1281 = vunpack.c.h.b16 %v1252
        %v1282 = vunpack.c.l.b16 %v1253
        %v1283 = vunpack.c.h.b16 %v1253
        %v1284 = vunpack.c.l.b16 %v1254
        %v1285 = vunpack.c.h.b16 %v1254
        %v1286 = vunpack.c.l.b16 %v1255
        %v1287 = vunpack.c.h.b16 %v1255
        %v1288 = vunpack.c.l.b16 %v1256
        %v1289 = vunpack.c.h.b16 %v1256
        %v1290 = vunpack.c.l.b16 %v1257
        %v1291 = vunpack.c.h.b16 %v1257
        %v1292 = vunpack.c.l.b16 %v1258
        %v1293 = vunpack.c.h.b16 %v1258
        %v1294 = vunpack.c.l.b16 %v1259
        %v1295 = vunpack.c.h.b16 %v1259
        %v1296 = vpack.c.b16 %v1282, %v1280
        %v1297 = vpack.c.b16 %v1283, %v1281
        %v1298 = vpack.c.b16 %v1286, %v1284
        %v1299 = vpack.c.b16 %v1287, %v1285
        %v1300 = vpack.c.b16 %v1290, %v1288
        %v1301 = vpack.c.b16 %v1291, %v1289
        %v1302 = vpack.c.b16 %v1294, %v1292
        %v1303 = vpack.c.b16 %v1295, %v1293
        %v1313 = vsel %vm443, %v1251, 0
        %1315 = vmatprep.subr.bf16.mxu0 0
        %1316 = vmatpush1.bf16.msra.mxu0 0
        %1317 = vmatprep.subr.bf16.mxu0 0
        %1318 = vmatpush1.bf16.msra.mxu0 0
        %1319 = vmatprep.subr.bf16.mxu0 0
        %1320 = vmatpush1.bf16.msra.mxu0 0
        %1321 = vmatprep.subr.bf16.mxu0 0
        %1322 = vmatpush1.bf16.msra.mxu0 0
        %1323 = vmatprep.subr.bf16.mxu0 %v1303
        %1324 = vmatpush1.bf16.msra.mxu0 %v1302
        %1325 = vmatprep.subr.bf16.mxu0 %v1301
        %1326 = vmatpush1.bf16.msra.mxu0 %v1300
        %1327 = vmatprep.subr.bf16.mxu0 %v1299
        %1328 = vmatpush1.bf16.msra.mxu0 %v1298
        %1329 = vmatprep.subr.bf16.mxu0 %v1297
        %1330 = vmatpush1.bf16.msra.mxu0 %v1296
        %1331 = vmatprep.subr.bf16.mxu0 0
        %1332 = vmatpush2.bf16.msra.mxu0 0
        %1333 = vmatprep.subr.bf16.mxu0 0
        %1334 = vmatpush2.bf16.msra.mxu0 0
        %1335 = vmatprep.subr.bf16.mxu0 0
        %1336 = vmatpush2.bf16.msra.mxu0 0
        %1337 = vmatprep.subr.bf16.mxu0 0
        %1338 = vmatpush2.bf16.msra.mxu0 0
        %1339 = vmatprep.subr.bf16.mxu0 0
        %1340 = vmatpush2.bf16.msra.mxu0 0
        %1341 = vmatprep.subr.bf16.mxu0 0
        %1342 = vmatpush2.bf16.msra.mxu0 0
        %1343 = vmatprep.subr.bf16.mxu0 0
        %1344 = vmatpush2.bf16.msra.mxu0 0
        %1345 = vmatprep.subr.bf16.mxu0 0
        %1346 = vmatpush2.bf16.msra.mxu0 0
        %1347 = vmatprep.mubr.bf16.mxu0 0
        %1348 = vmatmul.mubr.bf16.gmra.mxu0 %v1313
        %v1349 = vpop.f32.mrf.mxu0
        %v1350 = vadd.f32 %v1265, %v1349
        %v1351 = vpop.f32.mrf.mxu0
        %v1352 = vadd.f32 %v1269, %v1351
        %v1353 = vpop.f32.mrf.mxu0
        %v1354 = vadd.f32 %v1265, %v1353
        %v1355 = vpop.f32.mrf.mxu0
        %v1356 = vadd.f32 %v1269, %v1355
        %1357 = vdwg.mxu0
        %v1358 = vmul.f32 %v1350, %v1350
        %v1359 = vmul.f32 %v1352, %v1352
        %v1360 = vmul.f32 %v1354, %v1354
        %v1361 = vmul.f32 %v1356, %v1356
        %v1362 = vmul.f32 %v1350, %v1358
        %v1363 = vmul.f32 %v1352, %v1359
        %v1364 = vmul.f32 %v1354, %v1360
        %v1365 = vmul.f32 %v1356, %v1361
        %v1366 = vmul.f32 %v1362, 0.044715
        %v1367 = vmul.f32 %v1363, 0.044715
        %v1368 = vmul.f32 %v1364, 0.044715
        %v1369 = vmul.f32 %v1365, 0.044715
        %v1370 = vadd.f32 %v1350, %v1366
        %v1371 = vadd.f32 %v1352, %v1367
        %v1372 = vadd.f32 %v1354, %v1368
        %v1373 = vadd.f32 %v1356, %v1369
        %v1374 = vmul.f32 %v1370, 0.7978846
        %v1375 = vmul.f32 %v1371, 0.7978846
        %v1376 = vmul.f32 %v1372, 0.7978846
        %v1377 = vmul.f32 %v1373, 0.7978846
        %v1378 = vtanh.pop %v1374
        %v1379 = vtanh.pop %v1375
        %v1380 = vtanh.pop %v1376
        %v1381 = vtanh.pop %v1377
        %v1382 = vadd.f32 %v1378, 1.0
        %v1383 = vadd.f32 %v1379, 1.0
        %v1384 = vadd.f32 %v1380, 1.0
        %v1385 = vadd.f32 %v1381, 1.0
        %v1386 = vmul.f32 %v1382, 0.5
        %v1387 = vmul.f32 %v1383, 0.5
        %v1388 = vmul.f32 %v1384, 0.5
        %v1389 = vmul.f32 %v1385, 0.5
        %v1390 = vmul.f32 %v1350, %v1386
        %v1391 = vmul.f32 %v1352, %v1387
        %v1392 = vmul.f32 %v1354, %v1388
        %v1393 = vmul.f32 %v1356, %v1389
        %v1394 = vpack.c.bf16 %v1392, %v1390
        %v1395 = vpack.c.bf16 %v1393, %v1391
        %v1396 = vld [vmem:[%s421] sm:$0xf]
        %v1397 = vld [vmem:[%s421 + $0x4] sm:$0xf]
        %v1398 = vld [vmem:[%s421 + $0x8] sm:$0xf]
        %v1399 = vld [vmem:[%s421 + $0xc] sm:$0xf]
        %v1400 = vld [vmem:[%s421 + $0x10] sm:$0xf]
        %v1401 = vld [vmem:[%s421 + $0x14] sm:$0xf]
        %v1402 = vld [vmem:[%s421 + $0x18] sm:$0xf]
        %v1403 = vld [vmem:[%s421 + $0x1c] sm:$0xf]
        %v1404 = vld [vmem:[%s421 + $0x20] sm:$0xf]
        %v1405 = vld [vmem:[%s421 + $0x24] sm:$0xf]
        %v1406 = vld [vmem:[%s421 + $0x28] sm:$0xf]
        %v1407 = vld [vmem:[%s421 + $0x2c] sm:$0xf]
        %v1408 = vld [vmem:[%s421 + $0x30] sm:$0xf]
        %v1409 = vld [vmem:[%s421 + $0x34] sm:$0xf]
        %v1410 = vld [vmem:[%s421 + $0x38] sm:$0xf]
        %v1411 = vld [vmem:[%s421 + $0x3c] sm:$0xf]
        %v1412 = vld [vmem:[%s421 + $0x40] sm:$0xf]
        %v1413 = vld [vmem:[%s421 + $0x44] sm:$0xf]
        %v1414 = vld [vmem:[%s421 + $0x48] sm:$0xf]
        %v1415 = vld [vmem:[%s421 + $0x4c] sm:$0xf]
        %v1416 = vld [vmem:[%s421 + $0x50] sm:$0xf]
        %v1417 = vld [vmem:[%s421 + $0x54] sm:$0xf]
        %v1418 = vld [vmem:[%s421 + $0x58] sm:$0xf]
        %v1419 = vld [vmem:[%s421 + $0x5c] sm:$0xf]
        %v1420 = vld [vmem:[%s421 + $0x60] sm:$0xf]
        %v1421 = vld [vmem:[%s421 + $0x64] sm:$0xf]
        %v1422 = vld [vmem:[%s421 + $0x68] sm:$0xf]
        %v1423 = vld [vmem:[%s421 + $0x6c] sm:$0xf]
        %v1424 = vld [vmem:[%s421 + $0x70] sm:$0xf]
        %v1425 = vld [vmem:[%s421 + $0x74] sm:$0xf]
        %v1426 = vld [vmem:[%s421 + $0x78] sm:$0xf]
        %v1427 = vld [vmem:[%s421 + $0x7c] sm:$0xf]
        %v1460 = vunpack.c.l.b16 %v1396
        %v1461 = vunpack.c.l.b16 %v1397
        %v1462 = vunpack.c.l.b16 %v1398
        %v1463 = vunpack.c.l.b16 %v1399
        %v1464 = vunpack.c.l.b16 %v1400
        %v1465 = vunpack.c.l.b16 %v1401
        %v1466 = vunpack.c.l.b16 %v1402
        %v1467 = vunpack.c.l.b16 %v1403
        %v1468 = vunpack.c.l.b16 %v1404
        %v1469 = vunpack.c.l.b16 %v1405
        %v1470 = vunpack.c.l.b16 %v1406
        %v1471 = vunpack.c.l.b16 %v1407
        %v1472 = vunpack.c.l.b16 %v1408
        %v1473 = vunpack.c.l.b16 %v1409
        %v1474 = vunpack.c.l.b16 %v1410
        %v1475 = vunpack.c.l.b16 %v1411
        %v1476 = vunpack.c.l.b16 %v1412
        %v1477 = vunpack.c.l.b16 %v1413
        %v1478 = vunpack.c.l.b16 %v1414
        %v1479 = vunpack.c.l.b16 %v1415
        %v1480 = vunpack.c.l.b16 %v1416
        %v1481 = vunpack.c.l.b16 %v1417
        %v1482 = vunpack.c.l.b16 %v1418
        %v1483 = vunpack.c.l.b16 %v1419
        %v1484 = vunpack.c.l.b16 %v1420
        %v1485 = vunpack.c.l.b16 %v1421
        %v1486 = vunpack.c.l.b16 %v1422
        %v1487 = vunpack.c.l.b16 %v1423
        %v1488 = vunpack.c.l.b16 %v1424
        %v1489 = vunpack.c.l.b16 %v1425
        %v1490 = vunpack.c.l.b16 %v1426
        %v1491 = vunpack.c.l.b16 %v1427
        %v1492 = vpack.c.b16 %v1461, %v1460
        %v1493 = vpack.c.b16 %v1463, %v1462
        %v1494 = vpack.c.b16 %v1465, %v1464
        %v1495 = vpack.c.b16 %v1467, %v1466
        %v1496 = vpack.c.b16 %v1469, %v1468
        %v1497 = vpack.c.b16 %v1471, %v1470
        %v1498 = vpack.c.b16 %v1473, %v1472
        %v1499 = vpack.c.b16 %v1475, %v1474
        %v1500 = vpack.c.b16 %v1477, %v1476
        %v1501 = vpack.c.b16 %v1479, %v1478
        %v1502 = vpack.c.b16 %v1481, %v1480
        %v1503 = vpack.c.b16 %v1483, %v1482
        %v1504 = vpack.c.b16 %v1485, %v1484
        %v1505 = vpack.c.b16 %v1487, %v1486
        %v1506 = vpack.c.b16 %v1489, %v1488
        %v1507 = vpack.c.b16 %v1491, %v1490
        %1524 = vmatprep.subr.bf16.mxu0 0
        %1525 = vmatpush1.bf16.msra.mxu0 %v1499
        %1526 = vmatprep.subr.bf16.mxu0 0
        %1527 = vmatpush1.bf16.msra.mxu0 %v1498
        %1528 = vmatprep.subr.bf16.mxu0 0
        %1529 = vmatpush1.bf16.msra.mxu0 %v1497
        %1530 = vmatprep.subr.bf16.mxu0 0
        %1531 = vmatpush1.bf16.msra.mxu0 %v1496
        %1532 = vmatprep.subr.bf16.mxu0 0
        %1533 = vmatpush1.bf16.msra.mxu0 %v1495
        %1534 = vmatprep.subr.bf16.mxu0 0
        %1535 = vmatpush1.bf16.msra.mxu0 %v1494
        %1536 = vmatprep.subr.bf16.mxu0 0
        %1537 = vmatpush1.bf16.msra.mxu0 %v1493
        %1538 = vmatprep.subr.bf16.mxu0 0
        %1539 = vmatpush1.bf16.msra.mxu0 %v1492
        %1540 = vmatprep.subr.bf16.mxu0 0
        %1541 = vmatpush2.bf16.msra.mxu0 %v1507
        %1542 = vmatprep.subr.bf16.mxu0 0
        %1543 = vmatpush2.bf16.msra.mxu0 %v1506
        %1544 = vmatprep.subr.bf16.mxu0 0
        %1545 = vmatpush2.bf16.msra.mxu0 %v1505
        %1546 = vmatprep.subr.bf16.mxu0 0
        %1547 = vmatpush2.bf16.msra.mxu0 %v1504
        %1548 = vmatprep.subr.bf16.mxu0 0
        %1549 = vmatpush2.bf16.msra.mxu0 %v1503
        %1550 = vmatprep.subr.bf16.mxu0 0
        %1551 = vmatpush2.bf16.msra.mxu0 %v1502
        %1552 = vmatprep.subr.bf16.mxu0 0
        %1553 = vmatpush2.bf16.msra.mxu0 %v1501
        %1554 = vmatprep.subr.bf16.mxu0 0
        %1555 = vmatpush2.bf16.msra.mxu0 %v1500
        %1556 = vmatprep.mubr.bf16.mxu0 %v1395
        %1557 = vmatmul.mubr.bf16.gmra.mxu0 %v1394
        %v1558 = vpop.f32.mrf.mxu0
        %v1559 = vadd.f32 0.0, %v1558
        %v1560 = vpop.f32.mrf.mxu0
        %v1561 = vpop.f32.mrf.mxu0
        %v1562 = vadd.f32 0.0, %v1561
        %v1563 = vpop.f32.mrf.mxu0
        %1564 = vdwg.mxu0
        %v1565 = vadd.f32 %v1211, %v1559
        %v1566 = vadd.f32 %v1212, %v1562
        %v1567 = vlaneseq
        %v1568 = vshrl.u32 %v1567, 7
        %v1569 = vsub.s32 5, %v1568
        %v1570 = vrot.slane %v442, %v1569
        %v1571 = vadd.f32 %v1565, %v1570
        %v1572 = vadd.f32 %v1566, %v1570
        %1573 = vst.msk [vmem:[#allocation2] sm:$0xff] %vm443, %v1571
        %1574 = vst.msk [vmem:[#allocation2 + $0x8] sm:$0xff] %vm443, %v1572
        %p1575 = scmp.eq.s32.totalorder %s27, 1
        // Predicated region
        $region57: #{tpu_custom_call.1} parent=51 // pred_check
          %p1576 = pneg %p1575
        $region58: #{tpu_custom_call.1} parent=51 // pred_check_branch
          %1578 = sbr.rel (%p1576) target = $region60
        $region59: #{tpu_custom_call.1} parent=51 // pred_region
          %v1579 = vld [vmem:[%s7] sm:$0x1]
          %v1580 = vld [vmem:[%s7 + $0x1] sm:$0x1]
          %v1581 = vsel %vm443, %v1571, 0.0
          %1582 = vadd.xlane.f32.xlu0 %v1581
          %v1583 = vpop.xlane.xlu0 %1582
          %v1584 = vsel %vm443, %v1572, 0.0
          %1585 = vadd.xlane.f32.xlu0 %v1584
          %v1586 = vpop.xlane.xlu0 %1585
          %v1587 = vmul.f32 %v1583, %v450
          %v1588 = vmul.f32 %v1586, %v450
          %v1589 = vsub.f32 %v1571, %v1587
          %v1590 = vsub.f32 %v1572, %v1588
          %v1591 = vmul.f32 %v1589, %v1589
          %v1592 = vmul.f32 %v1590, %v1590
          %v1593 = vsel %vm443, %v1591, 0.0
          %1594 = vadd.xlane.f32.xlu0 %v1593
          %v1595 = vpop.xlane.xlu0 %1594
          %v1596 = vsel %vm443, %v1592, 0.0
          %1597 = vadd.xlane.f32.xlu0 %v1596
          %v1598 = vpop.xlane.xlu0 %1597
          %v1599 = vmul.f32 %v1595, %v450
          %v1600 = vmul.f32 %v1598, %v450
          %v1601 = vadd.f32 %v1599, 1e-05
          %v1602 = vadd.f32 %v1600, 1e-05
          %v1603 = vrsqrt.pop %v1601
          %v1604 = vrsqrt.pop %v1602
          %v1605 = vmul.f32 %v1589, %v1603
          %v1606 = vmul.f32 %v1590, %v1604
          %v1607 = vlaneseq
          %v1608 = vshrl.u32 %v1607, 7
          %v1609 = vsub.s32 0, %v1608
          %v1610 = vrot.slane %v1579, %v1609
          %v1611 = vmul.f32 %v1605, %v1610
          %v1612 = vmul.f32 %v1606, %v1610
          %v1613 = vlaneseq
          %v1614 = vshrl.u32 %v1613, 7
          %v1615 = vsub.s32 0, %v1614
          %v1616 = vrot.slane %v1580, %v1615
          %v1617 = vadd.f32 %v1611, %v1616
          %v1618 = vadd.f32 %v1612, %v1616
          %v1619 = vpack.c.bf16 %v1618, %v1617
          %v1621 = vunpack.c.l.b16 %v1619
          %v1622 = vunpack.c.h.b16 %v1619
          %v1623 = vpack.c.b16 %v1621, %v1621
          %v1624 = vpack.c.b16 %v1622, %v1622
          %vm1627 = vcmask 519168
          %1628 = vst.msk [vmem:[%s396] sm:$0xf] %vm1627, %v1623
          %1629 = vst.msk [vmem:[%s396 + $0x4] sm:$0xf] %vm1627, %v1624
        $region60: #{tpu_custom_call.1} parent=51 // pred_fallthru
          _
        %s1630 = sand.u32 %s245, 1
        %s1631 = scalar_lea.sflag [#allocation5], %s1630
        %s1632 = sand.u32 %s245, 1
        %s1633 = smul.addr %s1632, 8
        %s1634 = scalar_lea.vmem [#allocation4], %s1633
        // Predicated region
        $region61: #{tpu_custom_call.1} parent=51 // pred_check
          %p1635 = pneg %p255
        $region62: #{tpu_custom_call.1} parent=51 // pred_check_branch
          %1637 = sbr.rel (%p1635) target = $region64
        $region63: #{tpu_custom_call.1} parent=51 // pred_region
          %s1639 = ssub.s32 128, 128
          %1640 = vsyncadd %s1631, %s1639
          %s1641 = smul.addr %s26, 2
          %s1642 = smul.addr %s1641, 64
          %s1643 = scalar_lea.hbm %s8, %s1642
          %s1644 = sshll.u32 %s1634, 4
          %s1645 = int_to_ptr.vmem [resolvable:$true] %s1644
          %1650 = dma.vmem_to_hbm [thread:$0]  %s1645, 128, %s1643, %s1631, 64, 64, 4
        $region64: #{tpu_custom_call.1} parent=51 // pred_fallthru
          _
      $region52: #{tpu_custom_call.1} parent=5 // pred_fallthru
        _
      %p1651 = scmp.le.s32.totalorder 2, %s17
      // Predicated region
      $region65: #{tpu_custom_call.1} parent=5 // pred_check
        %p1652 = pneg %p1651
      $region66: #{tpu_custom_call.1} parent=5 // pred_check_branch
        %1654 = sbr.rel (%p1652) target = $region68
      $region67: #{tpu_custom_call.1} parent=5 // pred_region
        %s1655 = ssub.s32 %s17, 2
        // Predicated region
        $region69: #{tpu_custom_call.1} parent=67 // pred_check
          %p1656 = pneg %p261
        $region70: #{tpu_custom_call.1} parent=67 // pred_check_branch
          %1658 = sbr.rel (%p1656) target = $region72
        $region71: #{tpu_custom_call.1} parent=67 // pred_region
          %s1659 = sand.u32 %s246, 1
          %s1660 = scalar_lea.sflag [#allocation5], %s1659
          %s1661 = sand.u32 %s246, 1
          %s1662 = smul.addr %s1661, 8
          %s1663 = scalar_lea.vmem [#allocation4], %s1662
          %1664 = dma.done %s1660, 128
        $region72: #{tpu_custom_call.1} parent=67 // pred_fallthru
          _
      $region68: #{tpu_custom_call.1} parent=5 // pred_fallthru
        _
    $region6: #{tpu_custom_call.1} parent=1 // loop_footer
      %s21 = sadd.s32 1, %s17
    $region7: #{tpu_custom_call.1} parent=1 // loop_footer_branch
      %16 = sbr.rel target = $region3
    $region8: #{tpu_custom_call.1} parent=1 // loop_exit
      _
    %1665 = vsyncpa [#allocation5], 1
    %s1666 = scalar_lea.sflag [#allocation5], 1
    %1667 = vsyncpa %s1666, 1

</llo_original>
